<compile_context>
chip_gen: v5e
topology: v5e:2x2
jax: 0.10.0
libtpu: 0.0.40
codegen_flags: <defaults>
</compile_context>

<pallas_src>
import jax
import jax.numpy as jnp
from jax import lax
from jax.experimental import pallas as pl
from jax.experimental.pallas import tpu as pltpu


def bilstm_fc_kernel(emb_ref,                       # (T*B, E) f32, time-major rows
                     wih_ref, b_ref,                # (E, 8H), (1, 8H)  [fwd | bwd], gate order i,f,o,g
                     whh_f_ref, whh_b_ref,          # (H, 4H) each, gate order i,f,o,g
                     anx_ref,                       # (B, 1)
                     fcwf_ref, fcwb_ref,            # (1, H) each  (fc weights for h_f / h_b)
                     fcwa_ref, fcb_ref,             # (1, 1), (1, 1)
                     out_ref,                       # (B, 1)
                     xproj_ref):                    # VMEM scratch (T*B, 8H) f32
    TB = emb_ref.shape[0]
    H = whh_f_ref.shape[0]
    B = out_ref.shape[0]
    T = TB // B
    H4 = 4 * H

    # ---- Hoisted input projection: one big matmul for both directions, biases
    #      folded in. Replaces 2*T tiny per-step (B,E)x(E,4H) matmuls.
    xproj_ref[...] = (
        jnp.dot(emb_ref[...], wih_ref[...], preferred_element_type=jnp.float32)
        + b_ref[...])

    whh_f = whh_f_ref[...]
    whh_b = whh_b_ref[...]

    def cell(pre, h, c, whh):
        gates = pre + jnp.dot(h, whh, preferred_element_type=jnp.float32)
        # Reordered gate layout [i, f, o | g]: one sigmoid slab + one tanh slab
        # (2 EUP issue regions per step instead of 4).
        sig = jax.nn.sigmoid(gates[:, 0:3 * H])
        g_g = jnp.tanh(gates[:, 3 * H:4 * H])
        i_g = sig[:, 0:H]
        f_g = sig[:, H:2 * H]
        o_g = sig[:, 2 * H:3 * H]
        c_new = f_g * c + i_g * g_g
        h_new = o_g * jnp.tanh(c_new)
        return h_new, c_new

    def body(t, carry):
        h_f, c_f, h_b, c_b = carry
        off_f = pl.multiple_of(t * B, B)
        off_b = pl.multiple_of((T - 1 - t) * B, B)
        pre_f = xproj_ref[pl.ds(off_f, B), 0:H4]        # forward-direction slab
        pre_b = xproj_ref[pl.ds(off_b, B), H4:2 * H4]   # backward-direction slab
        # Interleave the two independent dependency chains.
        h_f, c_f = cell(pre_f, h_f, c_f, whh_f)
        h_b, c_b = cell(pre_b, h_b, c_b, whh_b)
        return h_f, c_f, h_b, c_b

    z = jnp.zeros((B, H), jnp.float32)
    h_f, _, h_b, _ = lax.fori_loop(0, T, body, (z, z, z, z), unroll=T <= 16)

    # ---- Final FC as VPU multiply + row-reduce (skip an N=1 MXU matmul); the
    #      per-direction split also avoids a lane-concat of h_f / h_b.
    out = (jnp.sum(h_f * fcwf_ref[...], axis=1, keepdims=True)
           + jnp.sum(h_b * fcwb_ref[...], axis=1, keepdims=True)
           + anx_ref[...] * fcwa_ref[...]
           + fcb_ref[...])
    out_ref[...] = out.astype(out_ref.dtype)


def lstm_model_forward(text, anxiety_feature, params):
    """text: (B, T) int32 token ids; anxiety_feature: (B, 1) float32."""
    B, T = text.shape
    E = params["embedding"].shape[1]
    H = params["whh_f"].shape[0]

    # Time-major gather: (T, B, E) directly, then a free contiguous collapse to
    # (T*B, E). Avoids materializing (B, T, E) + transposing (extra HBM trip).
    emb_tm = jnp.take(params["embedding"], text.T, axis=0)          # (T, B, E)
    emb2d = emb_tm.reshape(T * B, E)                                 # (T*B, E)

    # Reorder PyTorch gate columns [i, f, g, o] -> [i, f, o, g] (one-time, tiny).
    def reorder(w):
        return jnp.concatenate(
            [w[..., 0:2 * H], w[..., 3 * H:4 * H], w[..., 2 * H:3 * H]], axis=-1)

    wih_cat = jnp.concatenate(
        [reorder(params["wih_f"]), reorder(params["wih_b"])], axis=1)   # (E, 8H)
    b_cat = jnp.concatenate(
        [reorder(params["b_f"]), reorder(params["b_b"])], axis=1)       # (1, 8H)
    whh_f = reorder(params["whh_f"])                                    # (H, 4H)
    whh_b = reorder(params["whh_b"])                                    # (H, 4H)

    fcw_hf = params["fcw_h"][:H, :].T                                   # (1, H)
    fcw_hb = params["fcw_h"][H:, :].T                                   # (1, H)

    args = (emb2d, wih_cat, b_cat, whh_f, whh_b,
            anxiety_feature, fcw_hf, fcw_hb, params["fcw_a"], params["fcb"])

    # Explicit VMEM budget sized to the actual buffers (+ headroom), rather than
    # relying on the default scoped limit.
    xproj_bytes = T * B * 8 * H * 4
    arg_bytes = sum(int(a.size) * a.dtype.itemsize for a in args) + B * 4
    vmem_limit = min(2 * arg_bytes + xproj_bytes + (4 << 20), 128 << 20)

    vmem = pl.BlockSpec(memory_space=pltpu.MemorySpace.VMEM)
    out = pl.pallas_call(
        bilstm_fc_kernel,
        out_shape=jax.ShapeDtypeStruct((B, 1), jnp.float32),
        in_specs=[vmem] * len(args),
        out_specs=vmem,
        scratch_shapes=[pltpu.VMEM((T * B, 8 * H), jnp.float32)],
        compiler_params=pltpu.CompilerParams(vmem_limit_bytes=int(vmem_limit)),
    )(*args)
    return out
    # TODO(synk): batch-parallel grid for v7x megacore and bf16 weight storage
    # for v6e/v7x were left out at these tiny f32-verified test shapes.


def reference_forward(text, anxiety_feature, params):
    """Pure-JAX reference with PyTorch gate order / semantics (for verification)."""
    H = params["whh_f"].shape[0]
    embedded = jnp.take(params["embedding"], text, axis=0)  # (B, T, E)
    B, T, _ = embedded.shape

    def run_dir(wih, whh, b, reverse):
        h = jnp.zeros((B, H), jnp.float32)
        c = jnp.zeros((B, H), jnp.float32)
        ts = range(T - 1, -1, -1) if reverse else range(T)
        for t in ts:
            x_t = embedded[:, t, :]
            gates = x_t @ wih + h @ whh + b
            i_g = jax.nn.sigmoid(gates[:, 0:H])
            f_g = jax.nn.sigmoid(gates[:, H:2 * H])
            g_g = jnp.tanh(gates[:, 2 * H:3 * H])
            o_g = jax.nn.sigmoid(gates[:, 3 * H:4 * H])
            c = f_g * c + i_g * g_g
            h = o_g * jnp.tanh(c)
        return h

    h_f = run_dir(params["wih_f"], params["whh_f"], params["b_f"], False)
    h_b = run_dir(params["wih_b"], params["whh_b"], params["b_b"], True)
    hidden = jnp.concatenate([h_f, h_b], axis=1)
    return hidden @ params["fcw_h"] + anxiety_feature * params["fcw_a"] + params["fcb"]


def init_params(key, vocab_size, embedding_dim=128, hidden_dim=64):
    ks = jax.random.split(key, 10)
    E, H = embedding_dim, hidden_dim
    s = 0.1
    return {
        "embedding": s * jax.random.normal(ks[0], (vocab_size, E), jnp.float32),
        # LSTM weights stored pre-transposed in PyTorch gate order [i,f,g,o]:
        # W_ih^T (E, 4H), W_hh^T (H, 4H), combined biases (b_ih + b_hh) as (1, 4H).
        "wih_f": s * jax.random.normal(ks[1], (E, 4 * H), jnp.float32),
        "whh_f": s * jax.random.normal(ks[2], (H, 4 * H), jnp.float32),
        "b_f":   s * jax.random.normal(ks[3], (1, 4 * H), jnp.float32),
        "wih_b": s * jax.random.normal(ks[4], (E, 4 * H), jnp.float32),
        "whh_b": s * jax.random.normal(ks[5], (H, 4 * H), jnp.float32),
        "b_b":   s * jax.random.normal(ks[6], (1, 4 * H), jnp.float32),
        # fc: Linear(2H+1, 1) split into hidden part (2H,1), anxiety (1,1), bias (1,1)
        "fcw_h": s * jax.random.normal(ks[7], (2 * H, 1), jnp.float32),
        "fcw_a": s * jax.random.normal(ks[8], (1, 1), jnp.float32),
        "fcb":   s * jax.random.normal(ks[9], (1, 1), jnp.float32),
    }


if __name__ == "__main__":
    key = jax.random.PRNGKey(0)
    k_param, k_text, k_anx = jax.random.split(key, 3)

    vocab_size = 50
    batch, seq = 8, 8
    embedding_dim, hidden_dim = 128, 64

    params = init_params(k_param, vocab_size, embedding_dim, hidden_dim)
    text = jax.random.randint(k_text, (batch, seq), 0, vocab_size, dtype=jnp.int32)
    anxiety_feature = jax.random.uniform(k_anx, (batch, 1), jnp.float32)

    out = lstm_model_forward(text, anxiety_feature, params)
    out = jax.block_until_ready(out)

    ref = reference_forward(text, anxiety_feature, params)
    assert out.shape == (batch, 1)
    assert jnp.allclose(out, ref, rtol=1e-4, atol=1e-4), "mismatch vs reference"

    # TODO(synk): dropout is identity (eval-mode semantics); training-mode RNG
    # masking not implemented.
    print("KERNEL_OK")
</pallas_src>

<mosaic_0001>
module attributes {stable_mosaic.version = 11 : i64} {
  func.func @bilstm_fc_kernel(%arg0: memref<64x128xf32, #tpu.memory_space<vmem>>, %arg1: memref<128x512xf32, #tpu.memory_space<vmem>>, %arg2: memref<1x512xf32, #tpu.memory_space<vmem>>, %arg3: memref<64x256xf32, #tpu.memory_space<vmem>>, %arg4: memref<64x256xf32, #tpu.memory_space<vmem>>, %arg5: memref<8x1xf32, #tpu.memory_space<vmem>>, %arg6: memref<1x64xf32, #tpu.memory_space<vmem>>, %arg7: memref<1x64xf32, #tpu.memory_space<vmem>>, %arg8: memref<1x1xf32, #tpu.memory_space<vmem>>, %arg9: memref<1x1xf32, #tpu.memory_space<vmem>>, %arg10: memref<8x1xf32, #tpu.memory_space<vmem>>, %arg11: memref<64x512xf32, #tpu.memory_space<vmem>>) attributes {dimension_semantics = [], scalar_prefetch = 0 : i64, scratch_operands = 1 : i64, tpu.core_type = #tpu.core_type<tc>} {
    %c0 = arith.constant 0 : index
    %c0_0 = arith.constant 0 : index
    %0 = vector.load %arg0[%c0, %c0_0] : memref<64x128xf32, #tpu.memory_space<vmem>>, vector<64x128xf32>
    %c0_1 = arith.constant 0 : index
    %c0_2 = arith.constant 0 : index
    %1 = vector.load %arg1[%c0_1, %c0_2] : memref<128x512xf32, #tpu.memory_space<vmem>>, vector<128x512xf32>
    %cst = arith.constant dense<0.000000e+00> : vector<64x512xf32>
    %2 = tpu.matmul %0, %1, %cst {dimension_numbers = #tpu.dot_dimension_numbers<[1], [0], [0], [1], [0, 0, 1, 1], [], []>} : vector<64x128xf32>, vector<128x512xf32>, vector<64x512xf32> -> vector<64x512xf32>
    %c0_3 = arith.constant 0 : index
    %c0_4 = arith.constant 0 : index
    %3 = vector.load %arg2[%c0_3, %c0_4] : memref<1x512xf32, #tpu.memory_space<vmem>>, vector<1x512xf32>
    %4 = vector.broadcast %3 : vector<1x512xf32> to vector<64x512xf32>
    %5 = arith.addf %2, %4 : vector<64x512xf32>
    %c0_5 = arith.constant 0 : index
    %c0_6 = arith.constant 0 : index
    %6 = vector.load %arg11[%c0_5, %c0_6] : memref<64x512xf32, #tpu.memory_space<vmem>>, vector<64x512xf32>
    tpu.vector_store %arg11[%c0_5, %c0_6], %5 {strides = array<i32>} : memref<64x512xf32, #tpu.memory_space<vmem>>, vector<64x512xf32>,
    %c0_7 = arith.constant 0 : index
    %c0_8 = arith.constant 0 : index
    %7 = vector.load %arg3[%c0_7, %c0_8] : memref<64x256xf32, #tpu.memory_space<vmem>>, vector<64x256xf32>
    %c0_9 = arith.constant 0 : index
    %c0_10 = arith.constant 0 : index
    %8 = vector.load %arg4[%c0_9, %c0_10] : memref<64x256xf32, #tpu.memory_space<vmem>>, vector<64x256xf32>
    %cst_11 = arith.constant 0.000000e+00 : f32
    %9 = vector.broadcast %cst_11 : f32 to vector<8x64xf32>
    %c0_i32 = arith.constant 0 : i32
    %c8_i32 = arith.constant 8 : i32
    %10 = arith.muli %c0_i32, %c8_i32 : i32
    %11 = tpu.assume_multiple %10, 8 : i32
    %c7_i32 = arith.constant 7 : i32
    %12 = arith.subi %c7_i32, %c0_i32 : i32
    %c8_i32_12 = arith.constant 8 : i32
    %13 = arith.muli %12, %c8_i32_12 : i32
    %14 = tpu.assume_multiple %13, 8 : i32
    %15 = arith.index_cast %11 : i32 to index
    %c0_13 = arith.constant 0 : index
    %16 = vector.load %arg11[%15, %c0_13] : memref<64x512xf32, #tpu.memory_space<vmem>>, vector<8x256xf32>
    %17 = arith.index_cast %14 : i32 to index
    %c256 = arith.constant 256 : index
    %18 = vector.load %arg11[%17, %c256] : memref<64x512xf32, #tpu.memory_space<vmem>>, vector<8x256xf32>
    %cst_14 = arith.constant dense<0.000000e+00> : vector<8x256xf32>
    %19 = tpu.matmul %9, %7, %cst_14 {dimension_numbers = #tpu.dot_dimension_numbers<[1], [0], [0], [1], [0, 0, 1, 1], [], []>} : vector<8x64xf32>, vector<64x256xf32>, vector<8x256xf32> -> vector<8x256xf32>
    %20 = arith.addf %16, %19 : vector<8x256xf32>
    %21 = vector.extract_strided_slice %20 {offsets = [0, 0], sizes = [8, 192], strides = [1, 1]} : vector<8x256xf32> to vector<8x192xf32>
    %22 = arith.negf %21 : vector<8x192xf32>
    %23 = math.exp %22 : vector<8x192xf32>
    %cst_15 = arith.constant 1.000000e+00 : f32
    %24 = vector.broadcast %cst_15 : f32 to vector<8x192xf32>
    %25 = arith.addf %24, %23 : vector<8x192xf32>
    %26 = arith.divf %24, %25 : vector<8x192xf32>
    %27 = vector.extract_strided_slice %20 {offsets = [0, 192], sizes = [8, 64], strides = [1, 1]} : vector<8x256xf32> to vector<8x64xf32>
    %28 = math.tanh %27 : vector<8x64xf32>
    %29 = vector.extract_strided_slice %26 {offsets = [0, 0], sizes = [8, 64], strides = [1, 1]} : vector<8x192xf32> to vector<8x64xf32>
    %30 = vector.extract_strided_slice %26 {offsets = [0, 64], sizes = [8, 64], strides = [1, 1]} : vector<8x192xf32> to vector<8x64xf32>
    %31 = vector.extract_strided_slice %26 {offsets = [0, 128], sizes = [8, 64], strides = [1, 1]} : vector<8x192xf32> to vector<8x64xf32>
    %32 = arith.mulf %30, %9 : vector<8x64xf32>
    %33 = arith.mulf %29, %28 : vector<8x64xf32>
    %34 = arith.addf %32, %33 : vector<8x64xf32>
    %35 = math.tanh %34 : vector<8x64xf32>
    %36 = arith.mulf %31, %35 : vector<8x64xf32>
    %cst_16 = arith.constant dense<0.000000e+00> : vector<8x256xf32>
    %37 = tpu.matmul %9, %8, %cst_16 {dimension_numbers = #tpu.dot_dimension_numbers<[1], [0], [0], [1], [0, 0, 1, 1], [], []>} : vector<8x64xf32>, vector<64x256xf32>, vector<8x256xf32> -> vector<8x256xf32>
    %38 = arith.addf %18, %37 : vector<8x256xf32>
    %39 = vector.extract_strided_slice %38 {offsets = [0, 0], sizes = [8, 192], strides = [1, 1]} : vector<8x256xf32> to vector<8x192xf32>
    %40 = arith.negf %39 : vector<8x192xf32>
    %41 = math.exp %40 : vector<8x192xf32>
    %cst_17 = arith.constant 1.000000e+00 : f32
    %42 = vector.broadcast %cst_17 : f32 to vector<8x192xf32>
    %43 = arith.addf %42, %41 : vector<8x192xf32>
    %44 = arith.divf %42, %43 : vector<8x192xf32>
    %45 = vector.extract_strided_slice %38 {offsets = [0, 192], sizes = [8, 64], strides = [1, 1]} : vector<8x256xf32> to vector<8x64xf32>
    %46 = math.tanh %45 : vector<8x64xf32>
    %47 = vector.extract_strided_slice %44 {offsets = [0, 0], sizes = [8, 64], strides = [1, 1]} : vector<8x192xf32> to vector<8x64xf32>
    %48 = vector.extract_strided_slice %44 {offsets = [0, 64], sizes = [8, 64], strides = [1, 1]} : vector<8x192xf32> to vector<8x64xf32>
    %49 = vector.extract_strided_slice %44 {offsets = [0, 128], sizes = [8, 64], strides = [1, 1]} : vector<8x192xf32> to vector<8x64xf32>
    %50 = arith.mulf %48, %9 : vector<8x64xf32>
    %51 = arith.mulf %47, %46 : vector<8x64xf32>
    %52 = arith.addf %50, %51 : vector<8x64xf32>
    %53 = math.tanh %52 : vector<8x64xf32>
    %54 = arith.mulf %49, %53 : vector<8x64xf32>
    %c1_i32 = arith.constant 1 : i32
    %c8_i32_18 = arith.constant 8 : i32
    %55 = arith.muli %c1_i32, %c8_i32_18 : i32
    %56 = tpu.assume_multiple %55, 8 : i32
    %c7_i32_19 = arith.constant 7 : i32
    %57 = arith.subi %c7_i32_19, %c1_i32 : i32
    %c8_i32_20 = arith.constant 8 : i32
    %58 = arith.muli %57, %c8_i32_20 : i32
    %59 = tpu.assume_multiple %58, 8 : i32
    %60 = arith.index_cast %56 : i32 to index
    %c0_21 = arith.constant 0 : index
    %61 = vector.load %arg11[%60, %c0_21] : memref<64x512xf32, #tpu.memory_space<vmem>>, vector<8x256xf32>
    %62 = arith.index_cast %59 : i32 to index
    %c256_22 = arith.constant 256 : index
    %63 = vector.load %arg11[%62, %c256_22] : memref<64x512xf32, #tpu.memory_space<vmem>>, vector<8x256xf32>
    %cst_23 = arith.constant dense<0.000000e+00> : vector<8x256xf32>
    %64 = tpu.matmul %36, %7, %cst_23 {dimension_numbers = #tpu.dot_dimension_numbers<[1], [0], [0], [1], [0, 0, 1, 1], [], []>} : vector<8x64xf32>, vector<64x256xf32>, vector<8x256xf32> -> vector<8x256xf32>
    %65 = arith.addf %61, %64 : vector<8x256xf32>
    %66 = vector.extract_strided_slice %65 {offsets = [0, 0], sizes = [8, 192], strides = [1, 1]} : vector<8x256xf32> to vector<8x192xf32>
    %67 = arith.negf %66 : vector<8x192xf32>
    %68 = math.exp %67 : vector<8x192xf32>
    %cst_24 = arith.constant 1.000000e+00 : f32
    %69 = vector.broadcast %cst_24 : f32 to vector<8x192xf32>
    %70 = arith.addf %69, %68 : vector<8x192xf32>
    %71 = arith.divf %69, %70 : vector<8x192xf32>
    %72 = vector.extract_strided_slice %65 {offsets = [0, 192], sizes = [8, 64], strides = [1, 1]} : vector<8x256xf32> to vector<8x64xf32>
    %73 = math.tanh %72 : vector<8x64xf32>
    %74 = vector.extract_strided_slice %71 {offsets = [0, 0], sizes = [8, 64], strides = [1, 1]} : vector<8x192xf32> to vector<8x64xf32>
    %75 = vector.extract_strided_slice %71 {offsets = [0, 64], sizes = [8, 64], strides = [1, 1]} : vector<8x192xf32> to vector<8x64xf32>
    %76 = vector.extract_strided_slice %71 {offsets = [0, 128], sizes = [8, 64], strides = [1, 1]} : vector<8x192xf32> to vector<8x64xf32>
    %77 = arith.mulf %75, %34 : vector<8x64xf32>
    %78 = arith.mulf %74, %73 : vector<8x64xf32>
    %79 = arith.addf %77, %78 : vector<8x64xf32>
    %80 = math.tanh %79 : vector<8x64xf32>
    %81 = arith.mulf %76, %80 : vector<8x64xf32>
    %cst_25 = arith.constant dense<0.000000e+00> : vector<8x256xf32>
    %82 = tpu.matmul %54, %8, %cst_25 {dimension_numbers = #tpu.dot_dimension_numbers<[1], [0], [0], [1], [0, 0, 1, 1], [], []>} : vector<8x64xf32>, vector<64x256xf32>, vector<8x256xf32> -> vector<8x256xf32>
    %83 = arith.addf %63, %82 : vector<8x256xf32>
    %84 = vector.extract_strided_slice %83 {offsets = [0, 0], sizes = [8, 192], strides = [1, 1]} : vector<8x256xf32> to vector<8x192xf32>
    %85 = arith.negf %84 : vector<8x192xf32>
    %86 = math.exp %85 : vector<8x192xf32>
    %cst_26 = arith.constant 1.000000e+00 : f32
    %87 = vector.broadcast %cst_26 : f32 to vector<8x192xf32>
    %88 = arith.addf %87, %86 : vector<8x192xf32>
    %89 = arith.divf %87, %88 : vector<8x192xf32>
    %90 = vector.extract_strided_slice %83 {offsets = [0, 192], sizes = [8, 64], strides = [1, 1]} : vector<8x256xf32> to vector<8x64xf32>
    %91 = math.tanh %90 : vector<8x64xf32>
    %92 = vector.extract_strided_slice %89 {offsets = [0, 0], sizes = [8, 64], strides = [1, 1]} : vector<8x192xf32> to vector<8x64xf32>
    %93 = vector.extract_strided_slice %89 {offsets = [0, 64], sizes = [8, 64], strides = [1, 1]} : vector<8x192xf32> to vector<8x64xf32>
    %94 = vector.extract_strided_slice %89 {offsets = [0, 128], sizes = [8, 64], strides = [1, 1]} : vector<8x192xf32> to vector<8x64xf32>
    %95 = arith.mulf %93, %52 : vector<8x64xf32>
    %96 = arith.mulf %92, %91 : vector<8x64xf32>
    %97 = arith.addf %95, %96 : vector<8x64xf32>
    %98 = math.tanh %97 : vector<8x64xf32>
    %99 = arith.mulf %94, %98 : vector<8x64xf32>
    %c2_i32 = arith.constant 2 : i32
    %c8_i32_27 = arith.constant 8 : i32
    %100 = arith.muli %c2_i32, %c8_i32_27 : i32
    %101 = tpu.assume_multiple %100, 8 : i32
    %c7_i32_28 = arith.constant 7 : i32
    %102 = arith.subi %c7_i32_28, %c2_i32 : i32
    %c8_i32_29 = arith.constant 8 : i32
    %103 = arith.muli %102, %c8_i32_29 : i32
    %104 = tpu.assume_multiple %103, 8 : i32
    %105 = arith.index_cast %101 : i32 to index
    %c0_30 = arith.constant 0 : index
    %106 = vector.load %arg11[%105, %c0_30] : memref<64x512xf32, #tpu.memory_space<vmem>>, vector<8x256xf32>
    %107 = arith.index_cast %104 : i32 to index
    %c256_31 = arith.constant 256 : index
    %108 = vector.load %arg11[%107, %c256_31] : memref<64x512xf32, #tpu.memory_space<vmem>>, vector<8x256xf32>
    %cst_32 = arith.constant dense<0.000000e+00> : vector<8x256xf32>
    %109 = tpu.matmul %81, %7, %cst_32 {dimension_numbers = #tpu.dot_dimension_numbers<[1], [0], [0], [1], [0, 0, 1, 1], [], []>} : vector<8x64xf32>, vector<64x256xf32>, vector<8x256xf32> -> vector<8x256xf32>
    %110 = arith.addf %106, %109 : vector<8x256xf32>
    %111 = vector.extract_strided_slice %110 {offsets = [0, 0], sizes = [8, 192], strides = [1, 1]} : vector<8x256xf32> to vector<8x192xf32>
    %112 = arith.negf %111 : vector<8x192xf32>
    %113 = math.exp %112 : vector<8x192xf32>
    %cst_33 = arith.constant 1.000000e+00 : f32
    %114 = vector.broadcast %cst_33 : f32 to vector<8x192xf32>
    %115 = arith.addf %114, %113 : vector<8x192xf32>
    %116 = arith.divf %114, %115 : vector<8x192xf32>
    %117 = vector.extract_strided_slice %110 {offsets = [0, 192], sizes = [8, 64], strides = [1, 1]} : vector<8x256xf32> to vector<8x64xf32>
    %118 = math.tanh %117 : vector<8x64xf32>
    %119 = vector.extract_strided_slice %116 {offsets = [0, 0], sizes = [8, 64], strides = [1, 1]} : vector<8x192xf32> to vector<8x64xf32>
    %120 = vector.extract_strided_slice %116 {offsets = [0, 64], sizes = [8, 64], strides = [1, 1]} : vector<8x192xf32> to vector<8x64xf32>
    %121 = vector.extract_strided_slice %116 {offsets = [0, 128], sizes = [8, 64], strides = [1, 1]} : vector<8x192xf32> to vector<8x64xf32>
    %122 = arith.mulf %120, %79 : vector<8x64xf32>
    %123 = arith.mulf %119, %118 : vector<8x64xf32>
    %124 = arith.addf %122, %123 : vector<8x64xf32>
    %125 = math.tanh %124 : vector<8x64xf32>
    %126 = arith.mulf %121, %125 : vector<8x64xf32>
    %cst_34 = arith.constant dense<0.000000e+00> : vector<8x256xf32>
    %127 = tpu.matmul %99, %8, %cst_34 {dimension_numbers = #tpu.dot_dimension_numbers<[1], [0], [0], [1], [0, 0, 1, 1], [], []>} : vector<8x64xf32>, vector<64x256xf32>, vector<8x256xf32> -> vector<8x256xf32>
    %128 = arith.addf %108, %127 : vector<8x256xf32>
    %129 = vector.extract_strided_slice %128 {offsets = [0, 0], sizes = [8, 192], strides = [1, 1]} : vector<8x256xf32> to vector<8x192xf32>
    %130 = arith.negf %129 : vector<8x192xf32>
    %131 = math.exp %130 : vector<8x192xf32>
    %cst_35 = arith.constant 1.000000e+00 : f32
    %132 = vector.broadcast %cst_35 : f32 to vector<8x192xf32>
    %133 = arith.addf %132, %131 : vector<8x192xf32>
    %134 = arith.divf %132, %133 : vector<8x192xf32>
    %135 = vector.extract_strided_slice %128 {offsets = [0, 192], sizes = [8, 64], strides = [1, 1]} : vector<8x256xf32> to vector<8x64xf32>
    %136 = math.tanh %135 : vector<8x64xf32>
    %137 = vector.extract_strided_slice %134 {offsets = [0, 0], sizes = [8, 64], strides = [1, 1]} : vector<8x192xf32> to vector<8x64xf32>
    %138 = vector.extract_strided_slice %134 {offsets = [0, 64], sizes = [8, 64], strides = [1, 1]} : vector<8x192xf32> to vector<8x64xf32>
    %139 = vector.extract_strided_slice %134 {offsets = [0, 128], sizes = [8, 64], strides = [1, 1]} : vector<8x192xf32> to vector<8x64xf32>
    %140 = arith.mulf %138, %97 : vector<8x64xf32>
    %141 = arith.mulf %137, %136 : vector<8x64xf32>
    %142 = arith.addf %140, %141 : vector<8x64xf32>
    %143 = math.tanh %142 : vector<8x64xf32>
    %144 = arith.mulf %139, %143 : vector<8x64xf32>
    %c3_i32 = arith.constant 3 : i32
    %c8_i32_36 = arith.constant 8 : i32
    %145 = arith.muli %c3_i32, %c8_i32_36 : i32
    %146 = tpu.assume_multiple %145, 8 : i32
    %c7_i32_37 = arith.constant 7 : i32
    %147 = arith.subi %c7_i32_37, %c3_i32 : i32
    %c8_i32_38 = arith.constant 8 : i32
    %148 = arith.muli %147, %c8_i32_38 : i32
    %149 = tpu.assume_multiple %148, 8 : i32
    %150 = arith.index_cast %146 : i32 to index
    %c0_39 = arith.constant 0 : index
    %151 = vector.load %arg11[%150, %c0_39] : memref<64x512xf32, #tpu.memory_space<vmem>>, vector<8x256xf32>
    %152 = arith.index_cast %149 : i32 to index
    %c256_40 = arith.constant 256 : index
    %153 = vector.load %arg11[%152, %c256_40] : memref<64x512xf32, #tpu.memory_space<vmem>>, vector<8x256xf32>
    %cst_41 = arith.constant dense<0.000000e+00> : vector<8x256xf32>
    %154 = tpu.matmul %126, %7, %cst_41 {dimension_numbers = #tpu.dot_dimension_numbers<[1], [0], [0], [1], [0, 0, 1, 1], [], []>} : vector<8x64xf32>, vector<64x256xf32>, vector<8x256xf32> -> vector<8x256xf32>
    %155 = arith.addf %151, %154 : vector<8x256xf32>
    %156 = vector.extract_strided_slice %155 {offsets = [0, 0], sizes = [8, 192], strides = [1, 1]} : vector<8x256xf32> to vector<8x192xf32>
    %157 = arith.negf %156 : vector<8x192xf32>
    %158 = math.exp %157 : vector<8x192xf32>
    %cst_42 = arith.constant 1.000000e+00 : f32
    %159 = vector.broadcast %cst_42 : f32 to vector<8x192xf32>
    %160 = arith.addf %159, %158 : vector<8x192xf32>
    %161 = arith.divf %159, %160 : vector<8x192xf32>
    %162 = vector.extract_strided_slice %155 {offsets = [0, 192], sizes = [8, 64], strides = [1, 1]} : vector<8x256xf32> to vector<8x64xf32>
    %163 = math.tanh %162 : vector<8x64xf32>
    %164 = vector.extract_strided_slice %161 {offsets = [0, 0], sizes = [8, 64], strides = [1, 1]} : vector<8x192xf32> to vector<8x64xf32>
    %165 = vector.extract_strided_slice %161 {offsets = [0, 64], sizes = [8, 64], strides = [1, 1]} : vector<8x192xf32> to vector<8x64xf32>
    %166 = vector.extract_strided_slice %161 {offsets = [0, 128], sizes = [8, 64], strides = [1, 1]} : vector<8x192xf32> to vector<8x64xf32>
    %167 = arith.mulf %165, %124 : vector<8x64xf32>
    %168 = arith.mulf %164, %163 : vector<8x64xf32>
    %169 = arith.addf %167, %168 : vector<8x64xf32>
    %170 = math.tanh %169 : vector<8x64xf32>
    %171 = arith.mulf %166, %170 : vector<8x64xf32>
    %cst_43 = arith.constant dense<0.000000e+00> : vector<8x256xf32>
    %172 = tpu.matmul %144, %8, %cst_43 {dimension_numbers = #tpu.dot_dimension_numbers<[1], [0], [0], [1], [0, 0, 1, 1], [], []>} : vector<8x64xf32>, vector<64x256xf32>, vector<8x256xf32> -> vector<8x256xf32>
    %173 = arith.addf %153, %172 : vector<8x256xf32>
    %174 = vector.extract_strided_slice %173 {offsets = [0, 0], sizes = [8, 192], strides = [1, 1]} : vector<8x256xf32> to vector<8x192xf32>
    %175 = arith.negf %174 : vector<8x192xf32>
    %176 = math.exp %175 : vector<8x192xf32>
    %cst_44 = arith.constant 1.000000e+00 : f32
    %177 = vector.broadcast %cst_44 : f32 to vector<8x192xf32>
    %178 = arith.addf %177, %176 : vector<8x192xf32>
    %179 = arith.divf %177, %178 : vector<8x192xf32>
    %180 = vector.extract_strided_slice %173 {offsets = [0, 192], sizes = [8, 64], strides = [1, 1]} : vector<8x256xf32> to vector<8x64xf32>
    %181 = math.tanh %180 : vector<8x64xf32>
    %182 = vector.extract_strided_slice %179 {offsets = [0, 0], sizes = [8, 64], strides = [1, 1]} : vector<8x192xf32> to vector<8x64xf32>
    %183 = vector.extract_strided_slice %179 {offsets = [0, 64], sizes = [8, 64], strides = [1, 1]} : vector<8x192xf32> to vector<8x64xf32>
    %184 = vector.extract_strided_slice %179 {offsets = [0, 128], sizes = [8, 64], strides = [1, 1]} : vector<8x192xf32> to vector<8x64xf32>
    %185 = arith.mulf %183, %142 : vector<8x64xf32>
    %186 = arith.mulf %182, %181 : vector<8x64xf32>
    %187 = arith.addf %185, %186 : vector<8x64xf32>
    %188 = math.tanh %187 : vector<8x64xf32>
    %189 = arith.mulf %184, %188 : vector<8x64xf32>
    %c4_i32 = arith.constant 4 : i32
    %c8_i32_45 = arith.constant 8 : i32
    %190 = arith.muli %c4_i32, %c8_i32_45 : i32
    %191 = tpu.assume_multiple %190, 8 : i32
    %c7_i32_46 = arith.constant 7 : i32
    %192 = arith.subi %c7_i32_46, %c4_i32 : i32
    %c8_i32_47 = arith.constant 8 : i32
    %193 = arith.muli %192, %c8_i32_47 : i32
    %194 = tpu.assume_multiple %193, 8 : i32
    %195 = arith.index_cast %191 : i32 to index
    %c0_48 = arith.constant 0 : index
    %196 = vector.load %arg11[%195, %c0_48] : memref<64x512xf32, #tpu.memory_space<vmem>>, vector<8x256xf32>
    %197 = arith.index_cast %194 : i32 to index
    %c256_49 = arith.constant 256 : index
    %198 = vector.load %arg11[%197, %c256_49] : memref<64x512xf32, #tpu.memory_space<vmem>>, vector<8x256xf32>
    %cst_50 = arith.constant dense<0.000000e+00> : vector<8x256xf32>
    %199 = tpu.matmul %171, %7, %cst_50 {dimension_numbers = #tpu.dot_dimension_numbers<[1], [0], [0], [1], [0, 0, 1, 1], [], []>} : vector<8x64xf32>, vector<64x256xf32>, vector<8x256xf32> -> vector<8x256xf32>
    %200 = arith.addf %196, %199 : vector<8x256xf32>
    %201 = vector.extract_strided_slice %200 {offsets = [0, 0], sizes = [8, 192], strides = [1, 1]} : vector<8x256xf32> to vector<8x192xf32>
    %202 = arith.negf %201 : vector<8x192xf32>
    %203 = math.exp %202 : vector<8x192xf32>
    %cst_51 = arith.constant 1.000000e+00 : f32
    %204 = vector.broadcast %cst_51 : f32 to vector<8x192xf32>
    %205 = arith.addf %204, %203 : vector<8x192xf32>
    %206 = arith.divf %204, %205 : vector<8x192xf32>
    %207 = vector.extract_strided_slice %200 {offsets = [0, 192], sizes = [8, 64], strides = [1, 1]} : vector<8x256xf32> to vector<8x64xf32>
    %208 = math.tanh %207 : vector<8x64xf32>
    %209 = vector.extract_strided_slice %206 {offsets = [0, 0], sizes = [8, 64], strides = [1, 1]} : vector<8x192xf32> to vector<8x64xf32>
    %210 = vector.extract_strided_slice %206 {offsets = [0, 64], sizes = [8, 64], strides = [1, 1]} : vector<8x192xf32> to vector<8x64xf32>
    %211 = vector.extract_strided_slice %206 {offsets = [0, 128], sizes = [8, 64], strides = [1, 1]} : vector<8x192xf32> to vector<8x64xf32>
    %212 = arith.mulf %210, %169 : vector<8x64xf32>
    %213 = arith.mulf %209, %208 : vector<8x64xf32>
    %214 = arith.addf %212, %213 : vector<8x64xf32>
    %215 = math.tanh %214 : vector<8x64xf32>
    %216 = arith.mulf %211, %215 : vector<8x64xf32>
    %cst_52 = arith.constant dense<0.000000e+00> : vector<8x256xf32>
    %217 = tpu.matmul %189, %8, %cst_52 {dimension_numbers = #tpu.dot_dimension_numbers<[1], [0], [0], [1], [0, 0, 1, 1], [], []>} : vector<8x64xf32>, vector<64x256xf32>, vector<8x256xf32> -> vector<8x256xf32>
    %218 = arith.addf %198, %217 : vector<8x256xf32>
    %219 = vector.extract_strided_slice %218 {offsets = [0, 0], sizes = [8, 192], strides = [1, 1]} : vector<8x256xf32> to vector<8x192xf32>
    %220 = arith.negf %219 : vector<8x192xf32>
    %221 = math.exp %220 : vector<8x192xf32>
    %cst_53 = arith.constant 1.000000e+00 : f32
    %222 = vector.broadcast %cst_53 : f32 to vector<8x192xf32>
    %223 = arith.addf %222, %221 : vector<8x192xf32>
    %224 = arith.divf %222, %223 : vector<8x192xf32>
    %225 = vector.extract_strided_slice %218 {offsets = [0, 192], sizes = [8, 64], strides = [1, 1]} : vector<8x256xf32> to vector<8x64xf32>
    %226 = math.tanh %225 : vector<8x64xf32>
    %227 = vector.extract_strided_slice %224 {offsets = [0, 0], sizes = [8, 64], strides = [1, 1]} : vector<8x192xf32> to vector<8x64xf32>
    %228 = vector.extract_strided_slice %224 {offsets = [0, 64], sizes = [8, 64], strides = [1, 1]} : vector<8x192xf32> to vector<8x64xf32>
    %229 = vector.extract_strided_slice %224 {offsets = [0, 128], sizes = [8, 64], strides = [1, 1]} : vector<8x192xf32> to vector<8x64xf32>
    %230 = arith.mulf %228, %187 : vector<8x64xf32>
    %231 = arith.mulf %227, %226 : vector<8x64xf32>
    %232 = arith.addf %230, %231 : vector<8x64xf32>
    %233 = math.tanh %232 : vector<8x64xf32>
    %234 = arith.mulf %229, %233 : vector<8x64xf32>
    %c5_i32 = arith.constant 5 : i32
    %c8_i32_54 = arith.constant 8 : i32
    %235 = arith.muli %c5_i32, %c8_i32_54 : i32
    %236 = tpu.assume_multiple %235, 8 : i32
    %c7_i32_55 = arith.constant 7 : i32
    %237 = arith.subi %c7_i32_55, %c5_i32 : i32
    %c8_i32_56 = arith.constant 8 : i32
    %238 = arith.muli %237, %c8_i32_56 : i32
    %239 = tpu.assume_multiple %238, 8 : i32
    %240 = arith.index_cast %236 : i32 to index
    %c0_57 = arith.constant 0 : index
    %241 = vector.load %arg11[%240, %c0_57] : memref<64x512xf32, #tpu.memory_space<vmem>>, vector<8x256xf32>
    %242 = arith.index_cast %239 : i32 to index
    %c256_58 = arith.constant 256 : index
    %243 = vector.load %arg11[%242, %c256_58] : memref<64x512xf32, #tpu.memory_space<vmem>>, vector<8x256xf32>
    %cst_59 = arith.constant dense<0.000000e+00> : vector<8x256xf32>
    %244 = tpu.matmul %216, %7, %cst_59 {dimension_numbers = #tpu.dot_dimension_numbers<[1], [0], [0], [1], [0, 0, 1, 1], [], []>} : vector<8x64xf32>, vector<64x256xf32>, vector<8x256xf32> -> vector<8x256xf32>
    %245 = arith.addf %241, %244 : vector<8x256xf32>
    %246 = vector.extract_strided_slice %245 {offsets = [0, 0], sizes = [8, 192], strides = [1, 1]} : vector<8x256xf32> to vector<8x192xf32>
    %247 = arith.negf %246 : vector<8x192xf32>
    %248 = math.exp %247 : vector<8x192xf32>
    %cst_60 = arith.constant 1.000000e+00 : f32
    %249 = vector.broadcast %cst_60 : f32 to vector<8x192xf32>
    %250 = arith.addf %249, %248 : vector<8x192xf32>
    %251 = arith.divf %249, %250 : vector<8x192xf32>
    %252 = vector.extract_strided_slice %245 {offsets = [0, 192], sizes = [8, 64], strides = [1, 1]} : vector<8x256xf32> to vector<8x64xf32>
    %253 = math.tanh %252 : vector<8x64xf32>
    %254 = vector.extract_strided_slice %251 {offsets = [0, 0], sizes = [8, 64], strides = [1, 1]} : vector<8x192xf32> to vector<8x64xf32>
    %255 = vector.extract_strided_slice %251 {offsets = [0, 64], sizes = [8, 64], strides = [1, 1]} : vector<8x192xf32> to vector<8x64xf32>
    %256 = vector.extract_strided_slice %251 {offsets = [0, 128], sizes = [8, 64], strides = [1, 1]} : vector<8x192xf32> to vector<8x64xf32>
    %257 = arith.mulf %255, %214 : vector<8x64xf32>
    %258 = arith.mulf %254, %253 : vector<8x64xf32>
    %259 = arith.addf %257, %258 : vector<8x64xf32>
    %260 = math.tanh %259 : vector<8x64xf32>
    %261 = arith.mulf %256, %260 : vector<8x64xf32>
    %cst_61 = arith.constant dense<0.000000e+00> : vector<8x256xf32>
    %262 = tpu.matmul %234, %8, %cst_61 {dimension_numbers = #tpu.dot_dimension_numbers<[1], [0], [0], [1], [0, 0, 1, 1], [], []>} : vector<8x64xf32>, vector<64x256xf32>, vector<8x256xf32> -> vector<8x256xf32>
    %263 = arith.addf %243, %262 : vector<8x256xf32>
    %264 = vector.extract_strided_slice %263 {offsets = [0, 0], sizes = [8, 192], strides = [1, 1]} : vector<8x256xf32> to vector<8x192xf32>
    %265 = arith.negf %264 : vector<8x192xf32>
    %266 = math.exp %265 : vector<8x192xf32>
    %cst_62 = arith.constant 1.000000e+00 : f32
    %267 = vector.broadcast %cst_62 : f32 to vector<8x192xf32>
    %268 = arith.addf %267, %266 : vector<8x192xf32>
    %269 = arith.divf %267, %268 : vector<8x192xf32>
    %270 = vector.extract_strided_slice %263 {offsets = [0, 192], sizes = [8, 64], strides = [1, 1]} : vector<8x256xf32> to vector<8x64xf32>
    %271 = math.tanh %270 : vector<8x64xf32>
    %272 = vector.extract_strided_slice %269 {offsets = [0, 0], sizes = [8, 64], strides = [1, 1]} : vector<8x192xf32> to vector<8x64xf32>
    %273 = vector.extract_strided_slice %269 {offsets = [0, 64], sizes = [8, 64], strides = [1, 1]} : vector<8x192xf32> to vector<8x64xf32>
    %274 = vector.extract_strided_slice %269 {offsets = [0, 128], sizes = [8, 64], strides = [1, 1]} : vector<8x192xf32> to vector<8x64xf32>
    %275 = arith.mulf %273, %232 : vector<8x64xf32>
    %276 = arith.mulf %272, %271 : vector<8x64xf32>
    %277 = arith.addf %275, %276 : vector<8x64xf32>
    %278 = math.tanh %277 : vector<8x64xf32>
    %279 = arith.mulf %274, %278 : vector<8x64xf32>
    %c6_i32 = arith.constant 6 : i32
    %c8_i32_63 = arith.constant 8 : i32
    %280 = arith.muli %c6_i32, %c8_i32_63 : i32
    %281 = tpu.assume_multiple %280, 8 : i32
    %c7_i32_64 = arith.constant 7 : i32
    %282 = arith.subi %c7_i32_64, %c6_i32 : i32
    %c8_i32_65 = arith.constant 8 : i32
    %283 = arith.muli %282, %c8_i32_65 : i32
    %284 = tpu.assume_multiple %283, 8 : i32
    %285 = arith.index_cast %281 : i32 to index
    %c0_66 = arith.constant 0 : index
    %286 = vector.load %arg11[%285, %c0_66] : memref<64x512xf32, #tpu.memory_space<vmem>>, vector<8x256xf32>
    %287 = arith.index_cast %284 : i32 to index
    %c256_67 = arith.constant 256 : index
    %288 = vector.load %arg11[%287, %c256_67] : memref<64x512xf32, #tpu.memory_space<vmem>>, vector<8x256xf32>
    %cst_68 = arith.constant dense<0.000000e+00> : vector<8x256xf32>
    %289 = tpu.matmul %261, %7, %cst_68 {dimension_numbers = #tpu.dot_dimension_numbers<[1], [0], [0], [1], [0, 0, 1, 1], [], []>} : vector<8x64xf32>, vector<64x256xf32>, vector<8x256xf32> -> vector<8x256xf32>
    %290 = arith.addf %286, %289 : vector<8x256xf32>
    %291 = vector.extract_strided_slice %290 {offsets = [0, 0], sizes = [8, 192], strides = [1, 1]} : vector<8x256xf32> to vector<8x192xf32>
    %292 = arith.negf %291 : vector<8x192xf32>
    %293 = math.exp %292 : vector<8x192xf32>
    %cst_69 = arith.constant 1.000000e+00 : f32
    %294 = vector.broadcast %cst_69 : f32 to vector<8x192xf32>
    %295 = arith.addf %294, %293 : vector<8x192xf32>
    %296 = arith.divf %294, %295 : vector<8x192xf32>
    %297 = vector.extract_strided_slice %290 {offsets = [0, 192], sizes = [8, 64], strides = [1, 1]} : vector<8x256xf32> to vector<8x64xf32>
    %298 = math.tanh %297 : vector<8x64xf32>
    %299 = vector.extract_strided_slice %296 {offsets = [0, 0], sizes = [8, 64], strides = [1, 1]} : vector<8x192xf32> to vector<8x64xf32>
    %300 = vector.extract_strided_slice %296 {offsets = [0, 64], sizes = [8, 64], strides = [1, 1]} : vector<8x192xf32> to vector<8x64xf32>
    %301 = vector.extract_strided_slice %296 {offsets = [0, 128], sizes = [8, 64], strides = [1, 1]} : vector<8x192xf32> to vector<8x64xf32>
    %302 = arith.mulf %300, %259 : vector<8x64xf32>
    %303 = arith.mulf %299, %298 : vector<8x64xf32>
    %304 = arith.addf %302, %303 : vector<8x64xf32>
    %305 = math.tanh %304 : vector<8x64xf32>
    %306 = arith.mulf %301, %305 : vector<8x64xf32>
    %cst_70 = arith.constant dense<0.000000e+00> : vector<8x256xf32>
    %307 = tpu.matmul %279, %8, %cst_70 {dimension_numbers = #tpu.dot_dimension_numbers<[1], [0], [0], [1], [0, 0, 1, 1], [], []>} : vector<8x64xf32>, vector<64x256xf32>, vector<8x256xf32> -> vector<8x256xf32>
    %308 = arith.addf %288, %307 : vector<8x256xf32>
    %309 = vector.extract_strided_slice %308 {offsets = [0, 0], sizes = [8, 192], strides = [1, 1]} : vector<8x256xf32> to vector<8x192xf32>
    %310 = arith.negf %309 : vector<8x192xf32>
    %311 = math.exp %310 : vector<8x192xf32>
    %cst_71 = arith.constant 1.000000e+00 : f32
    %312 = vector.broadcast %cst_71 : f32 to vector<8x192xf32>
    %313 = arith.addf %312, %311 : vector<8x192xf32>
    %314 = arith.divf %312, %313 : vector<8x192xf32>
    %315 = vector.extract_strided_slice %308 {offsets = [0, 192], sizes = [8, 64], strides = [1, 1]} : vector<8x256xf32> to vector<8x64xf32>
    %316 = math.tanh %315 : vector<8x64xf32>
    %317 = vector.extract_strided_slice %314 {offsets = [0, 0], sizes = [8, 64], strides = [1, 1]} : vector<8x192xf32> to vector<8x64xf32>
    %318 = vector.extract_strided_slice %314 {offsets = [0, 64], sizes = [8, 64], strides = [1, 1]} : vector<8x192xf32> to vector<8x64xf32>
    %319 = vector.extract_strided_slice %314 {offsets = [0, 128], sizes = [8, 64], strides = [1, 1]} : vector<8x192xf32> to vector<8x64xf32>
    %320 = arith.mulf %318, %277 : vector<8x64xf32>
    %321 = arith.mulf %317, %316 : vector<8x64xf32>
    %322 = arith.addf %320, %321 : vector<8x64xf32>
    %323 = math.tanh %322 : vector<8x64xf32>
    %324 = arith.mulf %319, %323 : vector<8x64xf32>
    %c7_i32_72 = arith.constant 7 : i32
    %c8_i32_73 = arith.constant 8 : i32
    %325 = arith.muli %c7_i32_72, %c8_i32_73 : i32
    %326 = tpu.assume_multiple %325, 8 : i32
    %c7_i32_74 = arith.constant 7 : i32
    %327 = arith.subi %c7_i32_74, %c7_i32_72 : i32
    %c8_i32_75 = arith.constant 8 : i32
    %328 = arith.muli %327, %c8_i32_75 : i32
    %329 = tpu.assume_multiple %328, 8 : i32
    %330 = arith.index_cast %326 : i32 to index
    %c0_76 = arith.constant 0 : index
    %331 = vector.load %arg11[%330, %c0_76] : memref<64x512xf32, #tpu.memory_space<vmem>>, vector<8x256xf32>
    %332 = arith.index_cast %329 : i32 to index
    %c256_77 = arith.constant 256 : index
    %333 = vector.load %arg11[%332, %c256_77] : memref<64x512xf32, #tpu.memory_space<vmem>>, vector<8x256xf32>
    %cst_78 = arith.constant dense<0.000000e+00> : vector<8x256xf32>
    %334 = tpu.matmul %306, %7, %cst_78 {dimension_numbers = #tpu.dot_dimension_numbers<[1], [0], [0], [1], [0, 0, 1, 1], [], []>} : vector<8x64xf32>, vector<64x256xf32>, vector<8x256xf32> -> vector<8x256xf32>
    %335 = arith.addf %331, %334 : vector<8x256xf32>
    %336 = vector.extract_strided_slice %335 {offsets = [0, 0], sizes = [8, 192], strides = [1, 1]} : vector<8x256xf32> to vector<8x192xf32>
    %337 = arith.negf %336 : vector<8x192xf32>
    %338 = math.exp %337 : vector<8x192xf32>
    %cst_79 = arith.constant 1.000000e+00 : f32
    %339 = vector.broadcast %cst_79 : f32 to vector<8x192xf32>
    %340 = arith.addf %339, %338 : vector<8x192xf32>
    %341 = arith.divf %339, %340 : vector<8x192xf32>
    %342 = vector.extract_strided_slice %335 {offsets = [0, 192], sizes = [8, 64], strides = [1, 1]} : vector<8x256xf32> to vector<8x64xf32>
    %343 = math.tanh %342 : vector<8x64xf32>
    %344 = vector.extract_strided_slice %341 {offsets = [0, 0], sizes = [8, 64], strides = [1, 1]} : vector<8x192xf32> to vector<8x64xf32>
    %345 = vector.extract_strided_slice %341 {offsets = [0, 64], sizes = [8, 64], strides = [1, 1]} : vector<8x192xf32> to vector<8x64xf32>
    %346 = vector.extract_strided_slice %341 {offsets = [0, 128], sizes = [8, 64], strides = [1, 1]} : vector<8x192xf32> to vector<8x64xf32>
    %347 = arith.mulf %345, %304 : vector<8x64xf32>
    %348 = arith.mulf %344, %343 : vector<8x64xf32>
    %349 = arith.addf %347, %348 : vector<8x64xf32>
    %350 = math.tanh %349 : vector<8x64xf32>
    %351 = arith.mulf %346, %350 : vector<8x64xf32>
    %cst_80 = arith.constant dense<0.000000e+00> : vector<8x256xf32>
    %352 = tpu.matmul %324, %8, %cst_80 {dimension_numbers = #tpu.dot_dimension_numbers<[1], [0], [0], [1], [0, 0, 1, 1], [], []>} : vector<8x64xf32>, vector<64x256xf32>, vector<8x256xf32> -> vector<8x256xf32>
    %353 = arith.addf %333, %352 : vector<8x256xf32>
    %354 = vector.extract_strided_slice %353 {offsets = [0, 0], sizes = [8, 192], strides = [1, 1]} : vector<8x256xf32> to vector<8x192xf32>
    %355 = arith.negf %354 : vector<8x192xf32>
    %356 = math.exp %355 : vector<8x192xf32>
    %cst_81 = arith.constant 1.000000e+00 : f32
    %357 = vector.broadcast %cst_81 : f32 to vector<8x192xf32>
    %358 = arith.addf %357, %356 : vector<8x192xf32>
    %359 = arith.divf %357, %358 : vector<8x192xf32>
    %360 = vector.extract_strided_slice %353 {offsets = [0, 192], sizes = [8, 64], strides = [1, 1]} : vector<8x256xf32> to vector<8x64xf32>
    %361 = math.tanh %360 : vector<8x64xf32>
    %362 = vector.extract_strided_slice %359 {offsets = [0, 0], sizes = [8, 64], strides = [1, 1]} : vector<8x192xf32> to vector<8x64xf32>
    %363 = vector.extract_strided_slice %359 {offsets = [0, 64], sizes = [8, 64], strides = [1, 1]} : vector<8x192xf32> to vector<8x64xf32>
    %364 = vector.extract_strided_slice %359 {offsets = [0, 128], sizes = [8, 64], strides = [1, 1]} : vector<8x192xf32> to vector<8x64xf32>
    %365 = arith.mulf %363, %322 : vector<8x64xf32>
    %366 = arith.mulf %362, %361 : vector<8x64xf32>
    %367 = arith.addf %365, %366 : vector<8x64xf32>
    %368 = math.tanh %367 : vector<8x64xf32>
    %369 = arith.mulf %364, %368 : vector<8x64xf32>
    %c8_i32_82 = arith.constant 8 : i32
    %c0_83 = arith.constant 0 : index
    %c0_84 = arith.constant 0 : index
    %370 = vector.load %arg6[%c0_83, %c0_84] : memref<1x64xf32, #tpu.memory_space<vmem>>, vector<1x64xf32>
    %371 = vector.broadcast %370 : vector<1x64xf32> to vector<8x64xf32>
    %372 = arith.mulf %351, %371 : vector<8x64xf32>
    %cst_85 = arith.constant dense<0.000000e+00> : vector<8xf32>
    %373 = vector.multi_reduction <add>, %372, %cst_85 [1] : vector<8x64xf32> to vector<8xf32>
    %374 = vector.shape_cast %373 : vector<8xf32> to vector<8x1xf32>
    %c0_86 = arith.constant 0 : index
    %c0_87 = arith.constant 0 : index
    %375 = vector.load %arg7[%c0_86, %c0_87] : memref<1x64xf32, #tpu.memory_space<vmem>>, vector<1x64xf32>
    %376 = vector.broadcast %375 : vector<1x64xf32> to vector<8x64xf32>
    %377 = arith.mulf %369, %376 : vector<8x64xf32>
    %cst_88 = arith.constant dense<0.000000e+00> : vector<8xf32>
    %378 = vector.multi_reduction <add>, %377, %cst_88 [1] : vector<8x64xf32> to vector<8xf32>
    %379 = vector.shape_cast %378 : vector<8xf32> to vector<8x1xf32>
    %380 = arith.addf %374, %379 : vector<8x1xf32>
    %c0_89 = arith.constant 0 : index
    %c0_90 = arith.constant 0 : index
    %381 = vector.load %arg5[%c0_89, %c0_90] : memref<8x1xf32, #tpu.memory_space<vmem>>, vector<8x1xf32>
    %c0_91 = arith.constant 0 : index
    %c0_92 = arith.constant 0 : index
    %382 = vector.load %arg8[%c0_91, %c0_92] : memref<1x1xf32, #tpu.memory_space<vmem>>, vector<1x1xf32>
    %383 = vector.broadcast %382 : vector<1x1xf32> to vector<8x1xf32>
    %384 = arith.mulf %381, %383 : vector<8x1xf32>
    %385 = arith.addf %380, %384 : vector<8x1xf32>
    %c0_93 = arith.constant 0 : index
    %c0_94 = arith.constant 0 : index
    %386 = vector.load %arg9[%c0_93, %c0_94] : memref<1x1xf32, #tpu.memory_space<vmem>>, vector<1x1xf32>
    %387 = vector.broadcast %386 : vector<1x1xf32> to vector<8x1xf32>
    %388 = arith.addf %385, %387 : vector<8x1xf32>
    %c0_95 = arith.constant 0 : index
    %c0_96 = arith.constant 0 : index
    %389 = vector.load %arg10[%c0_95, %c0_96] : memref<8x1xf32, #tpu.memory_space<vmem>>, vector<8x1xf32>
    tpu.vector_store %arg10[%c0_95, %c0_96], %388 {strides = array<i32>} : memref<8x1xf32, #tpu.memory_space<vmem>>, vector<8x1xf32>,
    return
  }
}

</mosaic_0001>

<llo_original>
// kernel: tpu_custom_call.1
$region0: #{tpu_custom_call.1}
  #allocation0 [shape = 'u32[]', space=smem, size = 0x4, offset = 0x4, fixed_abs, tag = 'smem constant byte address 0x4 - core index']
  #allocation1 [shape = 'u32[72,128]{1,0:T(1,128)}', space=vmem, size = 0x9000, scoped, tag = 'internal scratch']
  #allocation2 [shape = 'f32[64,512]{1,0:T(8,128)}', space=vmem, size = 0x20000, scoped, tag = 'scratch operand']
  #allocation3 [shape = 'f32[1,1]{1,0:T(1,128)S(1)}', space=vmem, size = 0x200, scoped, tag = 'scoped memory for tpu_custom_call.1']
  #allocation4 [shape = 'f32[1,1]{1,0:T(1,128)S(1)}', space=vmem, size = 0x200, scoped, tag = 'scoped memory for tpu_custom_call.1']
  %s0 = inlined_call_operand.hbm [shape: f32[64,128], index: 0, kind: input, shape index: {}]
  %s1 = inlined_call_operand.hbm [shape: f32[128,512], index: 1, kind: input, shape index: {}]
  %s2 = inlined_call_operand.vmem [shape: f32[1,512], index: 2, kind: input, shape index: {}]
  %s3 = inlined_call_operand.hbm [shape: f32[64,256], index: 3, kind: input, shape index: {}]
  %s4 = inlined_call_operand.hbm [shape: f32[64,256], index: 4, kind: input, shape index: {}]
  %s5 = inlined_call_operand.vmem [shape: f32[8,1], index: 5, kind: input, shape index: {}]
  %s6 = inlined_call_operand.vmem [shape: f32[1,64], index: 6, kind: input, shape index: {}]
  %s7 = inlined_call_operand.vmem [shape: f32[1,64], index: 7, kind: input, shape index: {}]
  %s8 = inlined_call_operand.<no memory space> [shape: f32[1,1], index: 8, kind: input, shape index: {}]
  %s9 = inlined_call_operand.<no memory space> [shape: f32[1,1], index: 9, kind: input, shape index: {}]
  %s10 = inlined_call_operand.vmem [shape: f32[8,1], index: 10, kind: output, shape index: {}]
  %s11 = sld [smem:[#allocation0]]
  $region66: #{tpu_custom_call.1} parent=0
    _
  %s13 = ssub.s32 1, %s11
  %s14 = scalar_select 0, %s13, %s11
  %v15 = vstv %s8
  %16 = vst [vmem:[#allocation3] sm:$0x1] %v15
  %v17 = vstv %s9
  %18 = vst [vmem:[#allocation4] sm:$0x1] %v17
  $region1: #{tpu_custom_call.1} parent=0
    #allocation5 [shape = 'u8[32768]{0}', space=vmem, size = 0x8000, scoped, tag = 'input window, operand 0, single buffered']
    #allocation6 [shape = 's32[1]{0}', space=sflag, size = 0x4, scoped, tag = 'scoped memory for tpu_custom_call.1']
    #allocation7 [shape = 'u8[262144]{0}', space=vmem, size = 0x40000, scoped, tag = 'input window, operand 1, single buffered']
    #allocation8 [shape = 's32[1]{0}', space=sflag, size = 0x4, scoped, tag = 'scoped memory for tpu_custom_call.1']
    #allocation9 [shape = 'u8[65536]{0}', space=vmem, size = 0x10000, scoped, tag = 'input window, operand 3, single buffered']
    #allocation10 [shape = 'u8[65536]{0}', space=vmem, size = 0x10000, scoped, tag = 'input window, operand 4, single buffered']
    #allocation11 [shape = 's32[1]{0}', space=sflag, size = 0x4, scoped, tag = 'scoped memory for tpu_custom_call.1']
    %19 = vsyncpa [#allocation6], 0
    %20 = vsyncpa [#allocation8], 0
    %21 = vsyncpa [#allocation11], 0
    // Predicated region
    $region2: #{tpu_custom_call.1} parent=1 // pred_check
      _
    $region3: #{tpu_custom_call.1} parent=1 // pred_check_branch
      %23 = sbr.rel (0) target = $region5
    $region4: #{tpu_custom_call.1} parent=1 // pred_region
      %25 = vsyncadd [#allocation6], 0
      %s26 = sshll.u32 %s0, 4
      %s27 = int_to_ptr.hbm [resolvable:$true] %s26
      %s28 = sshll.u32 [#allocation5], 4
      %s29 = int_to_ptr.vmem [resolvable:$true] %s28
      %34 = dma.hbm_to_vmem [thread:$0]  %s27, 1024, %s29, [#allocation6], 128, 128, 8
    $region5: #{tpu_custom_call.1} parent=1 // pred_fallthru
      _
    // Predicated region
    $region6: #{tpu_custom_call.1} parent=1 // pred_check
      _
    $region7: #{tpu_custom_call.1} parent=1 // pred_check_branch
      %36 = sbr.rel (0) target = $region9
    $region8: #{tpu_custom_call.1} parent=1 // pred_region
      %38 = vsyncadd [#allocation8], 0
      %s39 = sshll.u32 %s1, 4
      %s40 = int_to_ptr.hbm [resolvable:$true] %s39
      %s41 = sshll.u32 [#allocation7], 4
      %s42 = int_to_ptr.vmem [resolvable:$true] %s41
      %47 = dma.hbm_to_vmem [thread:$0]  %s40, 8192, %s42, [#allocation8], 512, 512, 32
    $region9: #{tpu_custom_call.1} parent=1 // pred_fallthru
      _
    // Predicated region
    $region10: #{tpu_custom_call.1} parent=1 // pred_check
      _
    $region11: #{tpu_custom_call.1} parent=1 // pred_check_branch
      %49 = sbr.rel (0) target = $region13
    $region12: #{tpu_custom_call.1} parent=1 // pred_region
      _
    $region13: #{tpu_custom_call.1} parent=1 // pred_fallthru
      _
    // Predicated region
    $region14: #{tpu_custom_call.1} parent=1 // pred_check
      _
    $region15: #{tpu_custom_call.1} parent=1 // pred_check_branch
      %51 = sbr.rel (0) target = $region17
    $region16: #{tpu_custom_call.1} parent=1 // pred_region
      %53 = vsyncadd [#allocation8], 0
      %s54 = sshll.u32 %s3, 4
      %s55 = int_to_ptr.hbm [resolvable:$true] %s54
      %s56 = sshll.u32 [#allocation9], 4
      %s57 = int_to_ptr.vmem [resolvable:$true] %s56
      %62 = dma.hbm_to_vmem [thread:$0]  %s55, 2048, %s57, [#allocation8], 256, 256, 16
    $region17: #{tpu_custom_call.1} parent=1 // pred_fallthru
      _
    // Predicated region
    $region18: #{tpu_custom_call.1} parent=1 // pred_check
      _
    $region19: #{tpu_custom_call.1} parent=1 // pred_check_branch
      %64 = sbr.rel (0) target = $region21
    $region20: #{tpu_custom_call.1} parent=1 // pred_region
      %66 = vsyncadd [#allocation11], 0
      %s67 = sshll.u32 %s4, 4
      %s68 = int_to_ptr.hbm [resolvable:$true] %s67
      %s69 = sshll.u32 [#allocation10], 4
      %s70 = int_to_ptr.vmem [resolvable:$true] %s69
      %75 = dma.hbm_to_vmem [thread:$0]  %s68, 2048, %s70, [#allocation11], 256, 256, 16
    $region21: #{tpu_custom_call.1} parent=1 // pred_fallthru
      _
    // Predicated region
    $region22: #{tpu_custom_call.1} parent=1 // pred_check
      _
    $region23: #{tpu_custom_call.1} parent=1 // pred_check_branch
      %77 = sbr.rel (0) target = $region25
    $region24: #{tpu_custom_call.1} parent=1 // pred_region
      _
    $region25: #{tpu_custom_call.1} parent=1 // pred_fallthru
      _
    // Predicated region
    $region26: #{tpu_custom_call.1} parent=1 // pred_check
      _
    $region27: #{tpu_custom_call.1} parent=1 // pred_check_branch
      %79 = sbr.rel (0) target = $region29
    $region28: #{tpu_custom_call.1} parent=1 // pred_region
      _
    $region29: #{tpu_custom_call.1} parent=1 // pred_fallthru
      _
    // Predicated region
    $region30: #{tpu_custom_call.1} parent=1 // pred_check
      _
    $region31: #{tpu_custom_call.1} parent=1 // pred_check_branch
      %81 = sbr.rel (0) target = $region33
    $region32: #{tpu_custom_call.1} parent=1 // pred_region
      _
    $region33: #{tpu_custom_call.1} parent=1 // pred_fallthru
      _
    // Predicated region
    $region34: #{tpu_custom_call.1} parent=1 // pred_check
      _
    $region35: #{tpu_custom_call.1} parent=1 // pred_check_branch
      %83 = sbr.rel (0) target = $region37
    $region36: #{tpu_custom_call.1} parent=1 // pred_region
      _
    $region37: #{tpu_custom_call.1} parent=1 // pred_fallthru
      _
    // Predicated region
    $region38: #{tpu_custom_call.1} parent=1 // pred_check
      _
    $region39: #{tpu_custom_call.1} parent=1 // pred_check_branch
      %85 = sbr.rel (0) target = $region41
    $region40: #{tpu_custom_call.1} parent=1 // pred_region
      _
    $region41: #{tpu_custom_call.1} parent=1 // pred_fallthru
      _
    // Predicated region
    $region42: #{tpu_custom_call.1} parent=1 // pred_check
      _
    $region43: #{tpu_custom_call.1} parent=1 // pred_check_branch
      %87 = sbr.rel (0) target = $region45
    $region44: #{tpu_custom_call.1} parent=1 // pred_region
      %89 = dma.done [#allocation6], 1024
    $region45: #{tpu_custom_call.1} parent=1 // pred_fallthru
      _
    // Predicated region
    $region46: #{tpu_custom_call.1} parent=1 // pred_check
      _
    $region47: #{tpu_custom_call.1} parent=1 // pred_check_branch
      %91 = sbr.rel (0) target = $region49
    $region48: #{tpu_custom_call.1} parent=1 // pred_region
      %93 = dma.done [#allocation8], 8192
    $region49: #{tpu_custom_call.1} parent=1 // pred_fallthru
      _
    // Predicated region
    $region50: #{tpu_custom_call.1} parent=1 // pred_check
      _
    $region51: #{tpu_custom_call.1} parent=1 // pred_check_branch
      %95 = sbr.rel (0) target = $region53
    $region52: #{tpu_custom_call.1} parent=1 // pred_region
      %97 = dma.done [#allocation8], 2048
    $region53: #{tpu_custom_call.1} parent=1 // pred_fallthru
      _
    // Predicated region
    $region54: #{tpu_custom_call.1} parent=1 // pred_check
      _
    $region55: #{tpu_custom_call.1} parent=1 // pred_check_branch
      %99 = sbr.rel (0) target = $region57
    $region56: #{tpu_custom_call.1} parent=1 // pred_region
      %101 = dma.done [#allocation11], 2048
    $region57: #{tpu_custom_call.1} parent=1 // pred_fallthru
      _
    %v102 = vld [vmem:[#allocation5] sm:$0xff]
    %v103 = vld [vmem:[#allocation5 + $0x8] sm:$0xff]
    %v104 = vld [vmem:[#allocation5 + $0x10] sm:$0xff]
    %v105 = vld [vmem:[#allocation5 + $0x18] sm:$0xff]
    %v106 = vld [vmem:[#allocation5 + $0x20] sm:$0xff]
    %v107 = vld [vmem:[#allocation5 + $0x28] sm:$0xff]
    %v108 = vld [vmem:[#allocation5 + $0x30] sm:$0xff]
    %v109 = vld [vmem:[#allocation5 + $0x38] sm:$0xff]
    %v110 = vld [vmem:[#allocation7] sm:$0xff]
    %v111 = vld [vmem:[#allocation7 + $0x8] sm:$0xff]
    %v112 = vld [vmem:[#allocation7 + $0x10] sm:$0xff]
    %v113 = vld [vmem:[#allocation7 + $0x18] sm:$0xff]
    %v114 = vld [vmem:[#allocation7 + $0x20] sm:$0xff]
    %v115 = vld [vmem:[#allocation7 + $0x28] sm:$0xff]
    %v116 = vld [vmem:[#allocation7 + $0x30] sm:$0xff]
    %v117 = vld [vmem:[#allocation7 + $0x38] sm:$0xff]
    %v118 = vld [vmem:[#allocation7 + $0x40] sm:$0xff]
    %v119 = vld [vmem:[#allocation7 + $0x48] sm:$0xff]
    %v120 = vld [vmem:[#allocation7 + $0x50] sm:$0xff]
    %v121 = vld [vmem:[#allocation7 + $0x58] sm:$0xff]
    %v122 = vld [vmem:[#allocation7 + $0x60] sm:$0xff]
    %v123 = vld [vmem:[#allocation7 + $0x68] sm:$0xff]
    %v124 = vld [vmem:[#allocation7 + $0x70] sm:$0xff]
    %v125 = vld [vmem:[#allocation7 + $0x78] sm:$0xff]
    %v126 = vld [vmem:[#allocation7 + $0x80] sm:$0xff]
    %v127 = vld [vmem:[#allocation7 + $0x88] sm:$0xff]
    %v128 = vld [vmem:[#allocation7 + $0x90] sm:$0xff]
    %v129 = vld [vmem:[#allocation7 + $0x98] sm:$0xff]
    %v130 = vld [vmem:[#allocation7 + $0xa0] sm:$0xff]
    %v131 = vld [vmem:[#allocation7 + $0xa8] sm:$0xff]
    %v132 = vld [vmem:[#allocation7 + $0xb0] sm:$0xff]
    %v133 = vld [vmem:[#allocation7 + $0xb8] sm:$0xff]
    %v134 = vld [vmem:[#allocation7 + $0xc0] sm:$0xff]
    %v135 = vld [vmem:[#allocation7 + $0xc8] sm:$0xff]
    %v136 = vld [vmem:[#allocation7 + $0xd0] sm:$0xff]
    %v137 = vld [vmem:[#allocation7 + $0xd8] sm:$0xff]
    %v138 = vld [vmem:[#allocation7 + $0xe0] sm:$0xff]
    %v139 = vld [vmem:[#allocation7 + $0xe8] sm:$0xff]
    %v140 = vld [vmem:[#allocation7 + $0xf0] sm:$0xff]
    %v141 = vld [vmem:[#allocation7 + $0xf8] sm:$0xff]
    %v142 = vld [vmem:[#allocation7 + $0x100] sm:$0xff]
    %v143 = vld [vmem:[#allocation7 + $0x108] sm:$0xff]
    %v144 = vld [vmem:[#allocation7 + $0x110] sm:$0xff]
    %v145 = vld [vmem:[#allocation7 + $0x118] sm:$0xff]
    %v146 = vld [vmem:[#allocation7 + $0x120] sm:$0xff]
    %v147 = vld [vmem:[#allocation7 + $0x128] sm:$0xff]
    %v148 = vld [vmem:[#allocation7 + $0x130] sm:$0xff]
    %v149 = vld [vmem:[#allocation7 + $0x138] sm:$0xff]
    %v150 = vld [vmem:[#allocation7 + $0x140] sm:$0xff]
    %v151 = vld [vmem:[#allocation7 + $0x148] sm:$0xff]
    %v152 = vld [vmem:[#allocation7 + $0x150] sm:$0xff]
    %v153 = vld [vmem:[#allocation7 + $0x158] sm:$0xff]
    %v154 = vld [vmem:[#allocation7 + $0x160] sm:$0xff]
    %v155 = vld [vmem:[#allocation7 + $0x168] sm:$0xff]
    %v156 = vld [vmem:[#allocation7 + $0x170] sm:$0xff]
    %v157 = vld [vmem:[#allocation7 + $0x178] sm:$0xff]
    %v158 = vld [vmem:[#allocation7 + $0x180] sm:$0xff]
    %v159 = vld [vmem:[#allocation7 + $0x188] sm:$0xff]
    %v160 = vld [vmem:[#allocation7 + $0x190] sm:$0xff]
    %v161 = vld [vmem:[#allocation7 + $0x198] sm:$0xff]
    %v162 = vld [vmem:[#allocation7 + $0x1a0] sm:$0xff]
    %v163 = vld [vmem:[#allocation7 + $0x1a8] sm:$0xff]
    %v164 = vld [vmem:[#allocation7 + $0x1b0] sm:$0xff]
    %v165 = vld [vmem:[#allocation7 + $0x1b8] sm:$0xff]
    %v166 = vld [vmem:[#allocation7 + $0x1c0] sm:$0xff]
    %v167 = vld [vmem:[#allocation7 + $0x1c8] sm:$0xff]
    %v168 = vld [vmem:[#allocation7 + $0x1d0] sm:$0xff]
    %v169 = vld [vmem:[#allocation7 + $0x1d8] sm:$0xff]
    %v170 = vld [vmem:[#allocation7 + $0x1e0] sm:$0xff]
    %v171 = vld [vmem:[#allocation7 + $0x1e8] sm:$0xff]
    %v172 = vld [vmem:[#allocation7 + $0x1f0] sm:$0xff]
    %v173 = vld [vmem:[#allocation7 + $0x1f8] sm:$0xff]
    %v174 = vld [vmem:[%s2] sm:$0xf]
    %v176 = vperm.slane %v174, 0
    %v177 = vperm.slane %v174, 1
    %v178 = vperm.slane %v174, 2
    %v179 = vperm.slane %v174, 3
    %184 = vmatpush.msra.mxu0 %v170
    %185 = vmatpush.msra.mxu0 %v166
    %186 = vmatpush.msra.mxu0 %v162
    %187 = vmatpush.msra.mxu0 %v158
    %188 = vmatpush.msra.mxu0 %v154
    %189 = vmatpush.msra.mxu0 %v150
    %190 = vmatpush.msra.mxu0 %v146
    %191 = vmatpush.msra.mxu0 %v142
    %192 = vmatpush.msra.mxu0 %v138
    %193 = vmatpush.msra.mxu0 %v134
    %194 = vmatpush.msra.mxu0 %v130
    %195 = vmatpush.msra.mxu0 %v126
    %196 = vmatpush.msra.mxu0 %v122
    %197 = vmatpush.msra.mxu0 %v118
    %198 = vmatpush.msra.mxu0 %v114
    %199 = vmatpush.msra.mxu0 %v110
    %200 = vmatmul.f32.gmra.mxu0 %v102
    %v201 = vpop.f32.mrf.mxu0
    %v202 = vadd.f32 %v176, %v201
    %203 = vmatmul.f32.gmra.mxu0 %v103
    %v204 = vpop.f32.mrf.mxu0
    %v205 = vadd.f32 %v176, %v204
    %206 = vmatmul.f32.gmra.mxu0 %v104
    %v207 = vpop.f32.mrf.mxu0
    %v208 = vadd.f32 %v176, %v207
    %209 = vmatmul.f32.gmra.mxu0 %v105
    %v210 = vpop.f32.mrf.mxu0
    %v211 = vadd.f32 %v176, %v210
    %212 = vmatmul.f32.gmra.mxu0 %v106
    %v213 = vpop.f32.mrf.mxu0
    %v214 = vadd.f32 %v176, %v213
    %215 = vmatmul.f32.gmra.mxu0 %v107
    %v216 = vpop.f32.mrf.mxu0
    %v217 = vadd.f32 %v176, %v216
    %218 = vmatmul.f32.gmra.mxu0 %v108
    %v219 = vpop.f32.mrf.mxu0
    %v220 = vadd.f32 %v176, %v219
    %221 = vmatmul.f32.gmra.mxu0 %v109
    %v222 = vpop.f32.mrf.mxu0
    %v223 = vadd.f32 %v176, %v222
    %224 = vdwg.mxu0
    %225 = vmatpush.msra.mxu0 %v171
    %226 = vmatpush.msra.mxu0 %v167
    %227 = vmatpush.msra.mxu0 %v163
    %228 = vmatpush.msra.mxu0 %v159
    %229 = vmatpush.msra.mxu0 %v155
    %230 = vmatpush.msra.mxu0 %v151
    %231 = vmatpush.msra.mxu0 %v147
    %232 = vmatpush.msra.mxu0 %v143
    %233 = vmatpush.msra.mxu0 %v139
    %234 = vmatpush.msra.mxu0 %v135
    %235 = vmatpush.msra.mxu0 %v131
    %236 = vmatpush.msra.mxu0 %v127
    %237 = vmatpush.msra.mxu0 %v123
    %238 = vmatpush.msra.mxu0 %v119
    %239 = vmatpush.msra.mxu0 %v115
    %240 = vmatpush.msra.mxu0 %v111
    %241 = vmatmul.f32.gmra.mxu0 %v102
    %v242 = vpop.f32.mrf.mxu0
    %v243 = vadd.f32 %v177, %v242
    %244 = vmatmul.f32.gmra.mxu0 %v103
    %v245 = vpop.f32.mrf.mxu0
    %v246 = vadd.f32 %v177, %v245
    %247 = vmatmul.f32.gmra.mxu0 %v104
    %v248 = vpop.f32.mrf.mxu0
    %v249 = vadd.f32 %v177, %v248
    %250 = vmatmul.f32.gmra.mxu0 %v105
    %v251 = vpop.f32.mrf.mxu0
    %v252 = vadd.f32 %v177, %v251
    %253 = vmatmul.f32.gmra.mxu0 %v106
    %v254 = vpop.f32.mrf.mxu0
    %v255 = vadd.f32 %v177, %v254
    %256 = vmatmul.f32.gmra.mxu0 %v107
    %v257 = vpop.f32.mrf.mxu0
    %v258 = vadd.f32 %v177, %v257
    %259 = vmatmul.f32.gmra.mxu0 %v108
    %v260 = vpop.f32.mrf.mxu0
    %v261 = vadd.f32 %v177, %v260
    %262 = vmatmul.f32.gmra.mxu0 %v109
    %v263 = vpop.f32.mrf.mxu0
    %v264 = vadd.f32 %v177, %v263
    %265 = vdwg.mxu0
    %266 = vmatpush.msra.mxu0 %v172
    %267 = vmatpush.msra.mxu0 %v168
    %268 = vmatpush.msra.mxu0 %v164
    %269 = vmatpush.msra.mxu0 %v160
    %270 = vmatpush.msra.mxu0 %v156
    %271 = vmatpush.msra.mxu0 %v152
    %272 = vmatpush.msra.mxu0 %v148
    %273 = vmatpush.msra.mxu0 %v144
    %274 = vmatpush.msra.mxu0 %v140
    %275 = vmatpush.msra.mxu0 %v136
    %276 = vmatpush.msra.mxu0 %v132
    %277 = vmatpush.msra.mxu0 %v128
    %278 = vmatpush.msra.mxu0 %v124
    %279 = vmatpush.msra.mxu0 %v120
    %280 = vmatpush.msra.mxu0 %v116
    %281 = vmatpush.msra.mxu0 %v112
    %282 = vmatmul.f32.gmra.mxu0 %v102
    %v283 = vpop.f32.mrf.mxu0
    %v284 = vadd.f32 %v178, %v283
    %285 = vmatmul.f32.gmra.mxu0 %v103
    %v286 = vpop.f32.mrf.mxu0
    %v287 = vadd.f32 %v178, %v286
    %288 = vmatmul.f32.gmra.mxu0 %v104
    %v289 = vpop.f32.mrf.mxu0
    %v290 = vadd.f32 %v178, %v289
    %291 = vmatmul.f32.gmra.mxu0 %v105
    %v292 = vpop.f32.mrf.mxu0
    %v293 = vadd.f32 %v178, %v292
    %294 = vmatmul.f32.gmra.mxu0 %v106
    %v295 = vpop.f32.mrf.mxu0
    %v296 = vadd.f32 %v178, %v295
    %297 = vmatmul.f32.gmra.mxu0 %v107
    %v298 = vpop.f32.mrf.mxu0
    %v299 = vadd.f32 %v178, %v298
    %300 = vmatmul.f32.gmra.mxu0 %v108
    %v301 = vpop.f32.mrf.mxu0
    %v302 = vadd.f32 %v178, %v301
    %303 = vmatmul.f32.gmra.mxu0 %v109
    %v304 = vpop.f32.mrf.mxu0
    %v305 = vadd.f32 %v178, %v304
    %306 = vdwg.mxu0
    %307 = vmatpush.msra.mxu0 %v173
    %308 = vmatpush.msra.mxu0 %v169
    %309 = vmatpush.msra.mxu0 %v165
    %310 = vmatpush.msra.mxu0 %v161
    %311 = vmatpush.msra.mxu0 %v157
    %312 = vmatpush.msra.mxu0 %v153
    %313 = vmatpush.msra.mxu0 %v149
    %314 = vmatpush.msra.mxu0 %v145
    %315 = vmatpush.msra.mxu0 %v141
    %316 = vmatpush.msra.mxu0 %v137
    %317 = vmatpush.msra.mxu0 %v133
    %318 = vmatpush.msra.mxu0 %v129
    %319 = vmatpush.msra.mxu0 %v125
    %320 = vmatpush.msra.mxu0 %v121
    %321 = vmatpush.msra.mxu0 %v117
    %322 = vmatpush.msra.mxu0 %v113
    %323 = vmatmul.f32.gmra.mxu0 %v102
    %v324 = vpop.f32.mrf.mxu0
    %v325 = vadd.f32 %v179, %v324
    %326 = vmatmul.f32.gmra.mxu0 %v103
    %v327 = vpop.f32.mrf.mxu0
    %v328 = vadd.f32 %v179, %v327
    %329 = vmatmul.f32.gmra.mxu0 %v104
    %v330 = vpop.f32.mrf.mxu0
    %v331 = vadd.f32 %v179, %v330
    %332 = vmatmul.f32.gmra.mxu0 %v105
    %v333 = vpop.f32.mrf.mxu0
    %v334 = vadd.f32 %v179, %v333
    %335 = vmatmul.f32.gmra.mxu0 %v106
    %v336 = vpop.f32.mrf.mxu0
    %v337 = vadd.f32 %v179, %v336
    %338 = vmatmul.f32.gmra.mxu0 %v107
    %v339 = vpop.f32.mrf.mxu0
    %v340 = vadd.f32 %v179, %v339
    %341 = vmatmul.f32.gmra.mxu0 %v108
    %v342 = vpop.f32.mrf.mxu0
    %v343 = vadd.f32 %v179, %v342
    %344 = vmatmul.f32.gmra.mxu0 %v109
    %v345 = vpop.f32.mrf.mxu0
    %v346 = vadd.f32 %v179, %v345
    %347 = vdwg.mxu0
    %348 = vst [vmem:[#allocation2] sm:$0xff] %v202
    %349 = vst [vmem:[#allocation2 + $0x8] sm:$0xff] %v243
    %350 = vst [vmem:[#allocation2 + $0x10] sm:$0xff] %v284
    %351 = vst [vmem:[#allocation2 + $0x18] sm:$0xff] %v325
    %352 = vst [vmem:[#allocation2 + $0x20] sm:$0xff] %v205
    %353 = vst [vmem:[#allocation2 + $0x28] sm:$0xff] %v246
    %354 = vst [vmem:[#allocation2 + $0x30] sm:$0xff] %v287
    %355 = vst [vmem:[#allocation2 + $0x38] sm:$0xff] %v328
    %356 = vst [vmem:[#allocation2 + $0x40] sm:$0xff] %v208
    %357 = vst [vmem:[#allocation2 + $0x48] sm:$0xff] %v249
    %358 = vst [vmem:[#allocation2 + $0x50] sm:$0xff] %v290
    %359 = vst [vmem:[#allocation2 + $0x58] sm:$0xff] %v331
    %360 = vst [vmem:[#allocation2 + $0x60] sm:$0xff] %v211
    %361 = vst [vmem:[#allocation2 + $0x68] sm:$0xff] %v252
    %362 = vst [vmem:[#allocation2 + $0x70] sm:$0xff] %v293
    %363 = vst [vmem:[#allocation2 + $0x78] sm:$0xff] %v334
    %364 = vst [vmem:[#allocation2 + $0x80] sm:$0xff] %v214
    %365 = vst [vmem:[#allocation2 + $0x88] sm:$0xff] %v255
    %366 = vst [vmem:[#allocation2 + $0x90] sm:$0xff] %v296
    %367 = vst [vmem:[#allocation2 + $0x98] sm:$0xff] %v337
    %368 = vst [vmem:[#allocation2 + $0xa0] sm:$0xff] %v217
    %369 = vst [vmem:[#allocation2 + $0xa8] sm:$0xff] %v258
    %370 = vst [vmem:[#allocation2 + $0xb0] sm:$0xff] %v299
    %371 = vst [vmem:[#allocation2 + $0xb8] sm:$0xff] %v340
    %372 = vst [vmem:[#allocation2 + $0xc0] sm:$0xff] %v220
    %373 = vst [vmem:[#allocation2 + $0xc8] sm:$0xff] %v261
    %374 = vst [vmem:[#allocation2 + $0xd0] sm:$0xff] %v302
    %375 = vst [vmem:[#allocation2 + $0xd8] sm:$0xff] %v343
    %376 = vst [vmem:[#allocation2 + $0xe0] sm:$0xff] %v223
    %377 = vst [vmem:[#allocation2 + $0xe8] sm:$0xff] %v264
    %378 = vst [vmem:[#allocation2 + $0xf0] sm:$0xff] %v305
    %379 = vst [vmem:[#allocation2 + $0xf8] sm:$0xff] %v346
    %v380 = vld [vmem:[#allocation9] sm:$0xff]
    %v381 = vld [vmem:[#allocation9 + $0x8] sm:$0xff]
    %v382 = vld [vmem:[#allocation9 + $0x10] sm:$0xff]
    %v383 = vld [vmem:[#allocation9 + $0x18] sm:$0xff]
    %v384 = vld [vmem:[#allocation9 + $0x20] sm:$0xff]
    %v385 = vld [vmem:[#allocation9 + $0x28] sm:$0xff]
    %v386 = vld [vmem:[#allocation9 + $0x30] sm:$0xff]
    %v387 = vld [vmem:[#allocation9 + $0x38] sm:$0xff]
    %v388 = vld [vmem:[#allocation9 + $0x40] sm:$0xff]
    %v389 = vld [vmem:[#allocation9 + $0x48] sm:$0xff]
    %v390 = vld [vmem:[#allocation9 + $0x50] sm:$0xff]
    %v391 = vld [vmem:[#allocation9 + $0x58] sm:$0xff]
    %v392 = vld [vmem:[#allocation9 + $0x60] sm:$0xff]
    %v393 = vld [vmem:[#allocation9 + $0x68] sm:$0xff]
    %v394 = vld [vmem:[#allocation9 + $0x70] sm:$0xff]
    %v395 = vld [vmem:[#allocation9 + $0x78] sm:$0xff]
    %v396 = vld [vmem:[#allocation10] sm:$0xff]
    %v397 = vld [vmem:[#allocation10 + $0x8] sm:$0xff]
    %v398 = vld [vmem:[#allocation10 + $0x10] sm:$0xff]
    %v399 = vld [vmem:[#allocation10 + $0x18] sm:$0xff]
    %v400 = vld [vmem:[#allocation10 + $0x20] sm:$0xff]
    %v401 = vld [vmem:[#allocation10 + $0x28] sm:$0xff]
    %v402 = vld [vmem:[#allocation10 + $0x30] sm:$0xff]
    %v403 = vld [vmem:[#allocation10 + $0x38] sm:$0xff]
    %v404 = vld [vmem:[#allocation10 + $0x40] sm:$0xff]
    %v405 = vld [vmem:[#allocation10 + $0x48] sm:$0xff]
    %v406 = vld [vmem:[#allocation10 + $0x50] sm:$0xff]
    %v407 = vld [vmem:[#allocation10 + $0x58] sm:$0xff]
    %v408 = vld [vmem:[#allocation10 + $0x60] sm:$0xff]
    %v409 = vld [vmem:[#allocation10 + $0x68] sm:$0xff]
    %v410 = vld [vmem:[#allocation10 + $0x70] sm:$0xff]
    %v411 = vld [vmem:[#allocation10 + $0x78] sm:$0xff]
    %s412 = smul.u32 0, 4
    %s413 = smul.addr %s412, 8
    %s414 = scalar_lea.vmem [#allocation2], %s413
    %v415 = vld [vmem:[%s414] sm:$0xff]
    %v416 = vld [vmem:[%s414 + $0x8] sm:$0xff]
    %s417 = smul.u32 7, 4
    %s418 = smul.addr %s417, 8
    %s419 = scalar_lea.vmem [#allocation2], %s418
    %v420 = vld [vmem:[%s419 + $0x10] sm:$0xff]
    %v421 = vld [vmem:[%s419 + $0x18] sm:$0xff]
    %vm422 = vcmask 523264
    %v424 = vsel %vm422, 0.0, 0
    %426 = vmatpush.msra.mxu0 0.0
    %427 = vmatpush.msra.mxu0 0.0
    %428 = vmatpush.msra.mxu0 0.0
    %429 = vmatpush.msra.mxu0 0.0
    %430 = vmatpush.msra.mxu0 0.0
    %431 = vmatpush.msra.mxu0 0.0
    %432 = vmatpush.msra.mxu0 0.0
    %433 = vmatpush.msra.mxu0 0.0
    %434 = vmatpush.msra.mxu0 %v394
    %435 = vmatpush.msra.mxu0 %v392
    %436 = vmatpush.msra.mxu0 %v390
    %437 = vmatpush.msra.mxu0 %v388
    %438 = vmatpush.msra.mxu0 %v386
    %439 = vmatpush.msra.mxu0 %v384
    %440 = vmatpush.msra.mxu0 %v382
    %441 = vmatpush.msra.mxu0 %v380
    %442 = vmatmul.f32.gmra.mxu0 %v424
    %v443 = vpop.f32.mrf.mxu0
    %v444 = vadd.f32 0.0, %v443
    %445 = vdwg.mxu0
    %446 = vmatpush.msra.mxu0 0.0
    %447 = vmatpush.msra.mxu0 0.0
    %448 = vmatpush.msra.mxu0 0.0
    %449 = vmatpush.msra.mxu0 0.0
    %450 = vmatpush.msra.mxu0 0.0
    %451 = vmatpush.msra.mxu0 0.0
    %452 = vmatpush.msra.mxu0 0.0
    %453 = vmatpush.msra.mxu0 0.0
    %454 = vmatpush.msra.mxu0 %v395
    %455 = vmatpush.msra.mxu0 %v393
    %456 = vmatpush.msra.mxu0 %v391
    %457 = vmatpush.msra.mxu0 %v389
    %458 = vmatpush.msra.mxu0 %v387
    %459 = vmatpush.msra.mxu0 %v385
    %460 = vmatpush.msra.mxu0 %v383
    %461 = vmatpush.msra.mxu0 %v381
    %462 = vmatmul.f32.gmra.mxu0 %v424
    %v463 = vpop.f32.mrf.mxu0
    %v464 = vadd.f32 0.0, %v463
    %465 = vdwg.mxu0
    %v466 = vadd.f32 %v415, %v444
    %v467 = vadd.f32 %v416, %v464
    %v468 = vxor.u32 %v466, 2147483648
    %v469 = vxor.u32 %v467, 2147483648
    %v470 = vmul.f32 %v468, 1.442695
    %v471 = vpow.pop %v470
    %v472 = vmul.f32 %v469, 1.442695
    %v473 = vpow.pop %v472
    %v474 = vadd.f32 %v471, 1.0
    %v475 = vadd.f32 %v473, 1.0
    %v476 = vrcp.pop %v474
    %v477 = vmul.f32 %v474, %v476
    %v478 = vsub.f32 1.0, %v477
    %v479 = vmul.f32 %v476, %v478
    %v480 = vadd.f32 %v476, %v479
    %vm481 = vweird.f32 %v474
    %vm482 = vweird.f32 %v476
    %vm483 = vmor %vm481, %vm482
    %v484 = vsel %vm483, %v476, %v480
    %v485 = vand.u32 2147483647, %v474
    %vm486 = vcmp.eq.f32.partialorder %v485, 8.507059e+37
    %v487 = vand.u32 %v474, 2147483648
    %v488 = vor.u32 1.1754944e-38, %v487
    %v489 = vsel %vm486, %v488, %v484
    %v490 = vmul.f32 1.0, %v489
    %v491 = vrcp.pop %v475
    %v492 = vmul.f32 %v475, %v491
    %v493 = vsub.f32 1.0, %v492
    %v494 = vmul.f32 %v491, %v493
    %v495 = vadd.f32 %v491, %v494
    %vm496 = vweird.f32 %v475
    %vm497 = vweird.f32 %v491
    %vm498 = vmor %vm496, %vm497
    %v499 = vsel %vm498, %v491, %v495
    %v500 = vand.u32 2147483647, %v475
    %vm501 = vcmp.eq.f32.partialorder %v500, 8.507059e+37
    %v502 = vand.u32 %v475, 2147483648
    %v503 = vor.u32 1.1754944e-38, %v502
    %v504 = vsel %vm501, %v503, %v499
    %v505 = vmul.f32 1.0, %v504
    %v506 = vtanh.pop %v467
    %v507 = vmul.f32 %v490, 0.0
    %509 = vrot.lane.b32.xlu0 %v506, 64
    %v510 = vpop.permute.xlu0 %509
    %v512 = vmul.f32 %v490, %v510
    %514 = vrot.lane.b32.xlu0 %v512, 64
    %v515 = vpop.permute.xlu0 %514
    %v517 = vadd.f32 %v507, %v515
    %v518 = vtanh.pop %v517
    %520 = vrot.lane.b32.xlu0 %v518, 64
    %v521 = vpop.permute.xlu0 %520
    %v523 = vmul.f32 %v505, %v521
    %524 = vmatpush.msra.mxu0 0.0
    %525 = vmatpush.msra.mxu0 0.0
    %526 = vmatpush.msra.mxu0 0.0
    %527 = vmatpush.msra.mxu0 0.0
    %528 = vmatpush.msra.mxu0 0.0
    %529 = vmatpush.msra.mxu0 0.0
    %530 = vmatpush.msra.mxu0 0.0
    %531 = vmatpush.msra.mxu0 0.0
    %532 = vmatpush.msra.mxu0 %v410
    %533 = vmatpush.msra.mxu0 %v408
    %534 = vmatpush.msra.mxu0 %v406
    %535 = vmatpush.msra.mxu0 %v404
    %536 = vmatpush.msra.mxu0 %v402
    %537 = vmatpush.msra.mxu0 %v400
    %538 = vmatpush.msra.mxu0 %v398
    %539 = vmatpush.msra.mxu0 %v396
    %540 = vmatmul.f32.gmra.mxu0 %v424
    %v541 = vpop.f32.mrf.mxu0
    %v542 = vadd.f32 0.0, %v541
    %543 = vdwg.mxu0
    %544 = vmatpush.msra.mxu0 0.0
    %545 = vmatpush.msra.mxu0 0.0
    %546 = vmatpush.msra.mxu0 0.0
    %547 = vmatpush.msra.mxu0 0.0
    %548 = vmatpush.msra.mxu0 0.0
    %549 = vmatpush.msra.mxu0 0.0
    %550 = vmatpush.msra.mxu0 0.0
    %551 = vmatpush.msra.mxu0 0.0
    %552 = vmatpush.msra.mxu0 %v411
    %553 = vmatpush.msra.mxu0 %v409
    %554 = vmatpush.msra.mxu0 %v407
    %555 = vmatpush.msra.mxu0 %v405
    %556 = vmatpush.msra.mxu0 %v403
    %557 = vmatpush.msra.mxu0 %v401
    %558 = vmatpush.msra.mxu0 %v399
    %559 = vmatpush.msra.mxu0 %v397
    %560 = vmatmul.f32.gmra.mxu0 %v424
    %v561 = vpop.f32.mrf.mxu0
    %v562 = vadd.f32 0.0, %v561
    %563 = vdwg.mxu0
    %v564 = vadd.f32 %v420, %v542
    %v565 = vadd.f32 %v421, %v562
    %v566 = vxor.u32 %v564, 2147483648
    %v567 = vxor.u32 %v565, 2147483648
    %v568 = vmul.f32 %v566, 1.442695
    %v569 = vpow.pop %v568
    %v570 = vmul.f32 %v567, 1.442695
    %v571 = vpow.pop %v570
    %v572 = vadd.f32 %v569, 1.0
    %v573 = vadd.f32 %v571, 1.0
    %v574 = vrcp.pop %v572
    %v575 = vmul.f32 %v572, %v574
    %v576 = vsub.f32 1.0, %v575
    %v577 = vmul.f32 %v574, %v576
    %v578 = vadd.f32 %v574, %v577
    %vm579 = vweird.f32 %v572
    %vm580 = vweird.f32 %v574
    %vm581 = vmor %vm579, %vm580
    %v582 = vsel %vm581, %v574, %v578
    %v583 = vand.u32 2147483647, %v572
    %vm584 = vcmp.eq.f32.partialorder %v583, 8.507059e+37
    %v585 = vand.u32 %v572, 2147483648
    %v586 = vor.u32 1.1754944e-38, %v585
    %v587 = vsel %vm584, %v586, %v582
    %v588 = vmul.f32 1.0, %v587
    %v589 = vrcp.pop %v573
    %v590 = vmul.f32 %v573, %v589
    %v591 = vsub.f32 1.0, %v590
    %v592 = vmul.f32 %v589, %v591
    %v593 = vadd.f32 %v589, %v592
    %vm594 = vweird.f32 %v573
    %vm595 = vweird.f32 %v589
    %vm596 = vmor %vm594, %vm595
    %v597 = vsel %vm596, %v589, %v593
    %v598 = vand.u32 2147483647, %v573
    %vm599 = vcmp.eq.f32.partialorder %v598, 8.507059e+37
    %v600 = vand.u32 %v573, 2147483648
    %v601 = vor.u32 1.1754944e-38, %v600
    %v602 = vsel %vm599, %v601, %v597
    %v603 = vmul.f32 1.0, %v602
    %v604 = vtanh.pop %v565
    %v605 = vmul.f32 %v588, 0.0
    %607 = vrot.lane.b32.xlu0 %v604, 64
    %v608 = vpop.permute.xlu0 %607
    %v610 = vmul.f32 %v588, %v608
    %612 = vrot.lane.b32.xlu0 %v610, 64
    %v613 = vpop.permute.xlu0 %612
    %v615 = vadd.f32 %v605, %v613
    %v616 = vtanh.pop %v615
    %618 = vrot.lane.b32.xlu0 %v616, 64
    %v619 = vpop.permute.xlu0 %618
    %v621 = vmul.f32 %v603, %v619
    %s622 = smul.u32 1, 4
    %s623 = smul.addr %s622, 8
    %s624 = scalar_lea.vmem [#allocation2], %s623
    %v625 = vld [vmem:[%s624] sm:$0xff]
    %v626 = vld [vmem:[%s624 + $0x8] sm:$0xff]
    %s627 = smul.u32 6, 4
    %s628 = smul.addr %s627, 8
    %s629 = scalar_lea.vmem [#allocation2], %s628
    %v630 = vld [vmem:[%s629 + $0x10] sm:$0xff]
    %v631 = vld [vmem:[%s629 + $0x18] sm:$0xff]
    %v633 = vsel %vm422, %v523, 0
    %635 = vmatpush.msra.mxu0 0.0
    %636 = vmatpush.msra.mxu0 0.0
    %637 = vmatpush.msra.mxu0 0.0
    %638 = vmatpush.msra.mxu0 0.0
    %639 = vmatpush.msra.mxu0 0.0
    %640 = vmatpush.msra.mxu0 0.0
    %641 = vmatpush.msra.mxu0 0.0
    %642 = vmatpush.msra.mxu0 0.0
    %643 = vmatpush.msra.mxu0 %v394
    %644 = vmatpush.msra.mxu0 %v392
    %645 = vmatpush.msra.mxu0 %v390
    %646 = vmatpush.msra.mxu0 %v388
    %647 = vmatpush.msra.mxu0 %v386
    %648 = vmatpush.msra.mxu0 %v384
    %649 = vmatpush.msra.mxu0 %v382
    %650 = vmatpush.msra.mxu0 %v380
    %651 = vmatmul.f32.gmra.mxu0 %v633
    %v652 = vpop.f32.mrf.mxu0
    %v653 = vadd.f32 0.0, %v652
    %654 = vdwg.mxu0
    %655 = vmatpush.msra.mxu0 0.0
    %656 = vmatpush.msra.mxu0 0.0
    %657 = vmatpush.msra.mxu0 0.0
    %658 = vmatpush.msra.mxu0 0.0
    %659 = vmatpush.msra.mxu0 0.0
    %660 = vmatpush.msra.mxu0 0.0
    %661 = vmatpush.msra.mxu0 0.0
    %662 = vmatpush.msra.mxu0 0.0
    %663 = vmatpush.msra.mxu0 %v395
    %664 = vmatpush.msra.mxu0 %v393
    %665 = vmatpush.msra.mxu0 %v391
    %666 = vmatpush.msra.mxu0 %v389
    %667 = vmatpush.msra.mxu0 %v387
    %668 = vmatpush.msra.mxu0 %v385
    %669 = vmatpush.msra.mxu0 %v383
    %670 = vmatpush.msra.mxu0 %v381
    %671 = vmatmul.f32.gmra.mxu0 %v633
    %v672 = vpop.f32.mrf.mxu0
    %v673 = vadd.f32 0.0, %v672
    %674 = vdwg.mxu0
    %v675 = vadd.f32 %v625, %v653
    %v676 = vadd.f32 %v626, %v673
    %v677 = vxor.u32 %v675, 2147483648
    %v678 = vxor.u32 %v676, 2147483648
    %v679 = vmul.f32 %v677, 1.442695
    %v680 = vpow.pop %v679
    %v681 = vmul.f32 %v678, 1.442695
    %v682 = vpow.pop %v681
    %v683 = vadd.f32 %v680, 1.0
    %v684 = vadd.f32 %v682, 1.0
    %v685 = vrcp.pop %v683
    %v686 = vmul.f32 %v683, %v685
    %v687 = vsub.f32 1.0, %v686
    %v688 = vmul.f32 %v685, %v687
    %v689 = vadd.f32 %v685, %v688
    %vm690 = vweird.f32 %v683
    %vm691 = vweird.f32 %v685
    %vm692 = vmor %vm690, %vm691
    %v693 = vsel %vm692, %v685, %v689
    %v694 = vand.u32 2147483647, %v683
    %vm695 = vcmp.eq.f32.partialorder %v694, 8.507059e+37
    %v696 = vand.u32 %v683, 2147483648
    %v697 = vor.u32 1.1754944e-38, %v696
    %v698 = vsel %vm695, %v697, %v693
    %v699 = vmul.f32 1.0, %v698
    %v700 = vrcp.pop %v684
    %v701 = vmul.f32 %v684, %v700
    %v702 = vsub.f32 1.0, %v701
    %v703 = vmul.f32 %v700, %v702
    %v704 = vadd.f32 %v700, %v703
    %vm705 = vweird.f32 %v684
    %vm706 = vweird.f32 %v700
    %vm707 = vmor %vm705, %vm706
    %v708 = vsel %vm707, %v700, %v704
    %v709 = vand.u32 2147483647, %v684
    %vm710 = vcmp.eq.f32.partialorder %v709, 8.507059e+37
    %v711 = vand.u32 %v684, 2147483648
    %v712 = vor.u32 1.1754944e-38, %v711
    %v713 = vsel %vm710, %v712, %v708
    %v714 = vmul.f32 1.0, %v713
    %v715 = vtanh.pop %v676
    %v716 = vmul.f32 %v699, %v517
    %718 = vrot.lane.b32.xlu0 %v715, 64
    %v719 = vpop.permute.xlu0 %718
    %v721 = vmul.f32 %v699, %v719
    %723 = vrot.lane.b32.xlu0 %v721, 64
    %v724 = vpop.permute.xlu0 %723
    %v726 = vadd.f32 %v716, %v724
    %v727 = vtanh.pop %v726
    %729 = vrot.lane.b32.xlu0 %v727, 64
    %v730 = vpop.permute.xlu0 %729
    %v732 = vmul.f32 %v714, %v730
    %v734 = vsel %vm422, %v621, 0
    %736 = vmatpush.msra.mxu0 0.0
    %737 = vmatpush.msra.mxu0 0.0
    %738 = vmatpush.msra.mxu0 0.0
    %739 = vmatpush.msra.mxu0 0.0
    %740 = vmatpush.msra.mxu0 0.0
    %741 = vmatpush.msra.mxu0 0.0
    %742 = vmatpush.msra.mxu0 0.0
    %743 = vmatpush.msra.mxu0 0.0
    %744 = vmatpush.msra.mxu0 %v410
    %745 = vmatpush.msra.mxu0 %v408
    %746 = vmatpush.msra.mxu0 %v406
    %747 = vmatpush.msra.mxu0 %v404
    %748 = vmatpush.msra.mxu0 %v402
    %749 = vmatpush.msra.mxu0 %v400
    %750 = vmatpush.msra.mxu0 %v398
    %751 = vmatpush.msra.mxu0 %v396
    %752 = vmatmul.f32.gmra.mxu0 %v734
    %v753 = vpop.f32.mrf.mxu0
    %v754 = vadd.f32 0.0, %v753
    %755 = vdwg.mxu0
    %756 = vmatpush.msra.mxu0 0.0
    %757 = vmatpush.msra.mxu0 0.0
    %758 = vmatpush.msra.mxu0 0.0
    %759 = vmatpush.msra.mxu0 0.0
    %760 = vmatpush.msra.mxu0 0.0
    %761 = vmatpush.msra.mxu0 0.0
    %762 = vmatpush.msra.mxu0 0.0
    %763 = vmatpush.msra.mxu0 0.0
    %764 = vmatpush.msra.mxu0 %v411
    %765 = vmatpush.msra.mxu0 %v409
    %766 = vmatpush.msra.mxu0 %v407
    %767 = vmatpush.msra.mxu0 %v405
    %768 = vmatpush.msra.mxu0 %v403
    %769 = vmatpush.msra.mxu0 %v401
    %770 = vmatpush.msra.mxu0 %v399
    %771 = vmatpush.msra.mxu0 %v397
    %772 = vmatmul.f32.gmra.mxu0 %v734
    %v773 = vpop.f32.mrf.mxu0
    %v774 = vadd.f32 0.0, %v773
    %775 = vdwg.mxu0
    %v776 = vadd.f32 %v630, %v754
    %v777 = vadd.f32 %v631, %v774
    %v778 = vxor.u32 %v776, 2147483648
    %v779 = vxor.u32 %v777, 2147483648
    %v780 = vmul.f32 %v778, 1.442695
    %v781 = vpow.pop %v780
    %v782 = vmul.f32 %v779, 1.442695
    %v783 = vpow.pop %v782
    %v784 = vadd.f32 %v781, 1.0
    %v785 = vadd.f32 %v783, 1.0
    %v786 = vrcp.pop %v784
    %v787 = vmul.f32 %v784, %v786
    %v788 = vsub.f32 1.0, %v787
    %v789 = vmul.f32 %v786, %v788
    %v790 = vadd.f32 %v786, %v789
    %vm791 = vweird.f32 %v784
    %vm792 = vweird.f32 %v786
    %vm793 = vmor %vm791, %vm792
    %v794 = vsel %vm793, %v786, %v790
    %v795 = vand.u32 2147483647, %v784
    %vm796 = vcmp.eq.f32.partialorder %v795, 8.507059e+37
    %v797 = vand.u32 %v784, 2147483648
    %v798 = vor.u32 1.1754944e-38, %v797
    %v799 = vsel %vm796, %v798, %v794
    %v800 = vmul.f32 1.0, %v799
    %v801 = vrcp.pop %v785
    %v802 = vmul.f32 %v785, %v801
    %v803 = vsub.f32 1.0, %v802
    %v804 = vmul.f32 %v801, %v803
    %v805 = vadd.f32 %v801, %v804
    %vm806 = vweird.f32 %v785
    %vm807 = vweird.f32 %v801
    %vm808 = vmor %vm806, %vm807
    %v809 = vsel %vm808, %v801, %v805
    %v810 = vand.u32 2147483647, %v785
    %vm811 = vcmp.eq.f32.partialorder %v810, 8.507059e+37
    %v812 = vand.u32 %v785, 2147483648
    %v813 = vor.u32 1.1754944e-38, %v812
    %v814 = vsel %vm811, %v813, %v809
    %v815 = vmul.f32 1.0, %v814
    %v816 = vtanh.pop %v777
    %v817 = vmul.f32 %v800, %v615
    %819 = vrot.lane.b32.xlu0 %v816, 64
    %v820 = vpop.permute.xlu0 %819
    %v822 = vmul.f32 %v800, %v820
    %824 = vrot.lane.b32.xlu0 %v822, 64
    %v825 = vpop.permute.xlu0 %824
    %v827 = vadd.f32 %v817, %v825
    %v828 = vtanh.pop %v827
    %830 = vrot.lane.b32.xlu0 %v828, 64
    %v831 = vpop.permute.xlu0 %830
    %v833 = vmul.f32 %v815, %v831
    %s834 = smul.u32 2, 4
    %s835 = smul.addr %s834, 8
    %s836 = scalar_lea.vmem [#allocation2], %s835
    %v837 = vld [vmem:[%s836] sm:$0xff]
    %v838 = vld [vmem:[%s836 + $0x8] sm:$0xff]
    %s839 = smul.u32 5, 4
    %s840 = smul.addr %s839, 8
    %s841 = scalar_lea.vmem [#allocation2], %s840
    %v842 = vld [vmem:[%s841 + $0x10] sm:$0xff]
    %v843 = vld [vmem:[%s841 + $0x18] sm:$0xff]
    %v845 = vsel %vm422, %v732, 0
    %847 = vmatpush.msra.mxu0 0.0
    %848 = vmatpush.msra.mxu0 0.0
    %849 = vmatpush.msra.mxu0 0.0
    %850 = vmatpush.msra.mxu0 0.0
    %851 = vmatpush.msra.mxu0 0.0
    %852 = vmatpush.msra.mxu0 0.0
    %853 = vmatpush.msra.mxu0 0.0
    %854 = vmatpush.msra.mxu0 0.0
    %855 = vmatpush.msra.mxu0 %v394
    %856 = vmatpush.msra.mxu0 %v392
    %857 = vmatpush.msra.mxu0 %v390
    %858 = vmatpush.msra.mxu0 %v388
    %859 = vmatpush.msra.mxu0 %v386
    %860 = vmatpush.msra.mxu0 %v384
    %861 = vmatpush.msra.mxu0 %v382
    %862 = vmatpush.msra.mxu0 %v380
    %863 = vmatmul.f32.gmra.mxu0 %v845
    %v864 = vpop.f32.mrf.mxu0
    %v865 = vadd.f32 0.0, %v864
    %866 = vdwg.mxu0
    %867 = vmatpush.msra.mxu0 0.0
    %868 = vmatpush.msra.mxu0 0.0
    %869 = vmatpush.msra.mxu0 0.0
    %870 = vmatpush.msra.mxu0 0.0
    %871 = vmatpush.msra.mxu0 0.0
    %872 = vmatpush.msra.mxu0 0.0
    %873 = vmatpush.msra.mxu0 0.0
    %874 = vmatpush.msra.mxu0 0.0
    %875 = vmatpush.msra.mxu0 %v395
    %876 = vmatpush.msra.mxu0 %v393
    %877 = vmatpush.msra.mxu0 %v391
    %878 = vmatpush.msra.mxu0 %v389
    %879 = vmatpush.msra.mxu0 %v387
    %880 = vmatpush.msra.mxu0 %v385
    %881 = vmatpush.msra.mxu0 %v383
    %882 = vmatpush.msra.mxu0 %v381
    %883 = vmatmul.f32.gmra.mxu0 %v845
    %v884 = vpop.f32.mrf.mxu0
    %v885 = vadd.f32 0.0, %v884
    %886 = vdwg.mxu0
    %v887 = vadd.f32 %v837, %v865
    %v888 = vadd.f32 %v838, %v885
    %v889 = vxor.u32 %v887, 2147483648
    %v890 = vxor.u32 %v888, 2147483648
    %v891 = vmul.f32 %v889, 1.442695
    %v892 = vpow.pop %v891
    %v893 = vmul.f32 %v890, 1.442695
    %v894 = vpow.pop %v893
    %v895 = vadd.f32 %v892, 1.0
    %v896 = vadd.f32 %v894, 1.0
    %v897 = vrcp.pop %v895
    %v898 = vmul.f32 %v895, %v897
    %v899 = vsub.f32 1.0, %v898
    %v900 = vmul.f32 %v897, %v899
    %v901 = vadd.f32 %v897, %v900
    %vm902 = vweird.f32 %v895
    %vm903 = vweird.f32 %v897
    %vm904 = vmor %vm902, %vm903
    %v905 = vsel %vm904, %v897, %v901
    %v906 = vand.u32 2147483647, %v895
    %vm907 = vcmp.eq.f32.partialorder %v906, 8.507059e+37
    %v908 = vand.u32 %v895, 2147483648
    %v909 = vor.u32 1.1754944e-38, %v908
    %v910 = vsel %vm907, %v909, %v905
    %v911 = vmul.f32 1.0, %v910
    %v912 = vrcp.pop %v896
    %v913 = vmul.f32 %v896, %v912
    %v914 = vsub.f32 1.0, %v913
    %v915 = vmul.f32 %v912, %v914
    %v916 = vadd.f32 %v912, %v915
    %vm917 = vweird.f32 %v896
    %vm918 = vweird.f32 %v912
    %vm919 = vmor %vm917, %vm918
    %v920 = vsel %vm919, %v912, %v916
    %v921 = vand.u32 2147483647, %v896
    %vm922 = vcmp.eq.f32.partialorder %v921, 8.507059e+37
    %v923 = vand.u32 %v896, 2147483648
    %v924 = vor.u32 1.1754944e-38, %v923
    %v925 = vsel %vm922, %v924, %v920
    %v926 = vmul.f32 1.0, %v925
    %v927 = vtanh.pop %v888
    %v928 = vmul.f32 %v911, %v726
    %930 = vrot.lane.b32.xlu0 %v927, 64
    %v931 = vpop.permute.xlu0 %930
    %v933 = vmul.f32 %v911, %v931
    %935 = vrot.lane.b32.xlu0 %v933, 64
    %v936 = vpop.permute.xlu0 %935
    %v938 = vadd.f32 %v928, %v936
    %v939 = vtanh.pop %v938
    %941 = vrot.lane.b32.xlu0 %v939, 64
    %v942 = vpop.permute.xlu0 %941
    %v944 = vmul.f32 %v926, %v942
    %v946 = vsel %vm422, %v833, 0
    %948 = vmatpush.msra.mxu0 0.0
    %949 = vmatpush.msra.mxu0 0.0
    %950 = vmatpush.msra.mxu0 0.0
    %951 = vmatpush.msra.mxu0 0.0
    %952 = vmatpush.msra.mxu0 0.0
    %953 = vmatpush.msra.mxu0 0.0
    %954 = vmatpush.msra.mxu0 0.0
    %955 = vmatpush.msra.mxu0 0.0
    %956 = vmatpush.msra.mxu0 %v410
    %957 = vmatpush.msra.mxu0 %v408
    %958 = vmatpush.msra.mxu0 %v406
    %959 = vmatpush.msra.mxu0 %v404
    %960 = vmatpush.msra.mxu0 %v402
    %961 = vmatpush.msra.mxu0 %v400
    %962 = vmatpush.msra.mxu0 %v398
    %963 = vmatpush.msra.mxu0 %v396
    %964 = vmatmul.f32.gmra.mxu0 %v946
    %v965 = vpop.f32.mrf.mxu0
    %v966 = vadd.f32 0.0, %v965
    %967 = vdwg.mxu0
    %968 = vmatpush.msra.mxu0 0.0
    %969 = vmatpush.msra.mxu0 0.0
    %970 = vmatpush.msra.mxu0 0.0
    %971 = vmatpush.msra.mxu0 0.0
    %972 = vmatpush.msra.mxu0 0.0
    %973 = vmatpush.msra.mxu0 0.0
    %974 = vmatpush.msra.mxu0 0.0
    %975 = vmatpush.msra.mxu0 0.0
    %976 = vmatpush.msra.mxu0 %v411
    %977 = vmatpush.msra.mxu0 %v409
    %978 = vmatpush.msra.mxu0 %v407
    %979 = vmatpush.msra.mxu0 %v405
    %980 = vmatpush.msra.mxu0 %v403
    %981 = vmatpush.msra.mxu0 %v401
    %982 = vmatpush.msra.mxu0 %v399
    %983 = vmatpush.msra.mxu0 %v397
    %984 = vmatmul.f32.gmra.mxu0 %v946
    %v985 = vpop.f32.mrf.mxu0
    %v986 = vadd.f32 0.0, %v985
    %987 = vdwg.mxu0
    %v988 = vadd.f32 %v842, %v966
    %v989 = vadd.f32 %v843, %v986
    %v990 = vxor.u32 %v988, 2147483648
    %v991 = vxor.u32 %v989, 2147483648
    %v992 = vmul.f32 %v990, 1.442695
    %v993 = vpow.pop %v992
    %v994 = vmul.f32 %v991, 1.442695
    %v995 = vpow.pop %v994
    %v996 = vadd.f32 %v993, 1.0
    %v997 = vadd.f32 %v995, 1.0
    %v998 = vrcp.pop %v996
    %v999 = vmul.f32 %v996, %v998
    %v1000 = vsub.f32 1.0, %v999
    %v1001 = vmul.f32 %v998, %v1000
    %v1002 = vadd.f32 %v998, %v1001
    %vm1003 = vweird.f32 %v996
    %vm1004 = vweird.f32 %v998
    %vm1005 = vmor %vm1003, %vm1004
    %v1006 = vsel %vm1005, %v998, %v1002
    %v1007 = vand.u32 2147483647, %v996
    %vm1008 = vcmp.eq.f32.partialorder %v1007, 8.507059e+37
    %v1009 = vand.u32 %v996, 2147483648
    %v1010 = vor.u32 1.1754944e-38, %v1009
    %v1011 = vsel %vm1008, %v1010, %v1006
    %v1012 = vmul.f32 1.0, %v1011
    %v1013 = vrcp.pop %v997
    %v1014 = vmul.f32 %v997, %v1013
    %v1015 = vsub.f32 1.0, %v1014
    %v1016 = vmul.f32 %v1013, %v1015
    %v1017 = vadd.f32 %v1013, %v1016
    %vm1018 = vweird.f32 %v997
    %vm1019 = vweird.f32 %v1013
    %vm1020 = vmor %vm1018, %vm1019
    %v1021 = vsel %vm1020, %v1013, %v1017
    %v1022 = vand.u32 2147483647, %v997
    %vm1023 = vcmp.eq.f32.partialorder %v1022, 8.507059e+37
    %v1024 = vand.u32 %v997, 2147483648
    %v1025 = vor.u32 1.1754944e-38, %v1024
    %v1026 = vsel %vm1023, %v1025, %v1021
    %v1027 = vmul.f32 1.0, %v1026
    %v1028 = vtanh.pop %v989
    %v1029 = vmul.f32 %v1012, %v827
    %1031 = vrot.lane.b32.xlu0 %v1028, 64
    %v1032 = vpop.permute.xlu0 %1031
    %v1034 = vmul.f32 %v1012, %v1032
    %1036 = vrot.lane.b32.xlu0 %v1034, 64
    %v1037 = vpop.permute.xlu0 %1036
    %v1039 = vadd.f32 %v1029, %v1037
    %v1040 = vtanh.pop %v1039
    %1042 = vrot.lane.b32.xlu0 %v1040, 64
    %v1043 = vpop.permute.xlu0 %1042
    %v1045 = vmul.f32 %v1027, %v1043
    %s1046 = smul.u32 3, 4
    %s1047 = smul.addr %s1046, 8
    %s1048 = scalar_lea.vmem [#allocation2], %s1047
    %v1049 = vld [vmem:[%s1048] sm:$0xff]
    %v1050 = vld [vmem:[%s1048 + $0x8] sm:$0xff]
    %s1051 = smul.u32 4, 4
    %s1052 = smul.addr %s1051, 8
    %s1053 = scalar_lea.vmem [#allocation2], %s1052
    %v1054 = vld [vmem:[%s1053 + $0x10] sm:$0xff]
    %v1055 = vld [vmem:[%s1053 + $0x18] sm:$0xff]
    %v1057 = vsel %vm422, %v944, 0
    %1059 = vmatpush.msra.mxu0 0.0
    %1060 = vmatpush.msra.mxu0 0.0
    %1061 = vmatpush.msra.mxu0 0.0
    %1062 = vmatpush.msra.mxu0 0.0
    %1063 = vmatpush.msra.mxu0 0.0
    %1064 = vmatpush.msra.mxu0 0.0
    %1065 = vmatpush.msra.mxu0 0.0
    %1066 = vmatpush.msra.mxu0 0.0
    %1067 = vmatpush.msra.mxu0 %v394
    %1068 = vmatpush.msra.mxu0 %v392
    %1069 = vmatpush.msra.mxu0 %v390
    %1070 = vmatpush.msra.mxu0 %v388
    %1071 = vmatpush.msra.mxu0 %v386
    %1072 = vmatpush.msra.mxu0 %v384
    %1073 = vmatpush.msra.mxu0 %v382
    %1074 = vmatpush.msra.mxu0 %v380
    %1075 = vmatmul.f32.gmra.mxu0 %v1057
    %v1076 = vpop.f32.mrf.mxu0
    %v1077 = vadd.f32 0.0, %v1076
    %1078 = vdwg.mxu0
    %1079 = vmatpush.msra.mxu0 0.0
    %1080 = vmatpush.msra.mxu0 0.0
    %1081 = vmatpush.msra.mxu0 0.0
    %1082 = vmatpush.msra.mxu0 0.0
    %1083 = vmatpush.msra.mxu0 0.0
    %1084 = vmatpush.msra.mxu0 0.0
    %1085 = vmatpush.msra.mxu0 0.0
    %1086 = vmatpush.msra.mxu0 0.0
    %1087 = vmatpush.msra.mxu0 %v395
    %1088 = vmatpush.msra.mxu0 %v393
    %1089 = vmatpush.msra.mxu0 %v391
    %1090 = vmatpush.msra.mxu0 %v389
    %1091 = vmatpush.msra.mxu0 %v387
    %1092 = vmatpush.msra.mxu0 %v385
    %1093 = vmatpush.msra.mxu0 %v383
    %1094 = vmatpush.msra.mxu0 %v381
    %1095 = vmatmul.f32.gmra.mxu0 %v1057
    %v1096 = vpop.f32.mrf.mxu0
    %v1097 = vadd.f32 0.0, %v1096
    %1098 = vdwg.mxu0
    %v1099 = vadd.f32 %v1049, %v1077
    %v1100 = vadd.f32 %v1050, %v1097
    %v1101 = vxor.u32 %v1099, 2147483648
    %v1102 = vxor.u32 %v1100, 2147483648
    %v1103 = vmul.f32 %v1101, 1.442695
    %v1104 = vpow.pop %v1103
    %v1105 = vmul.f32 %v1102, 1.442695
    %v1106 = vpow.pop %v1105
    %v1107 = vadd.f32 %v1104, 1.0
    %v1108 = vadd.f32 %v1106, 1.0
    %v1109 = vrcp.pop %v1107
    %v1110 = vmul.f32 %v1107, %v1109
    %v1111 = vsub.f32 1.0, %v1110
    %v1112 = vmul.f32 %v1109, %v1111
    %v1113 = vadd.f32 %v1109, %v1112
    %vm1114 = vweird.f32 %v1107
    %vm1115 = vweird.f32 %v1109
    %vm1116 = vmor %vm1114, %vm1115
    %v1117 = vsel %vm1116, %v1109, %v1113
    %v1118 = vand.u32 2147483647, %v1107
    %vm1119 = vcmp.eq.f32.partialorder %v1118, 8.507059e+37
    %v1120 = vand.u32 %v1107, 2147483648
    %v1121 = vor.u32 1.1754944e-38, %v1120
    %v1122 = vsel %vm1119, %v1121, %v1117
    %v1123 = vmul.f32 1.0, %v1122
    %v1124 = vrcp.pop %v1108
    %v1125 = vmul.f32 %v1108, %v1124
    %v1126 = vsub.f32 1.0, %v1125
    %v1127 = vmul.f32 %v1124, %v1126
    %v1128 = vadd.f32 %v1124, %v1127
    %vm1129 = vweird.f32 %v1108
    %vm1130 = vweird.f32 %v1124
    %vm1131 = vmor %vm1129, %vm1130
    %v1132 = vsel %vm1131, %v1124, %v1128
    %v1133 = vand.u32 2147483647, %v1108
    %vm1134 = vcmp.eq.f32.partialorder %v1133, 8.507059e+37
    %v1135 = vand.u32 %v1108, 2147483648
    %v1136 = vor.u32 1.1754944e-38, %v1135
    %v1137 = vsel %vm1134, %v1136, %v1132
    %v1138 = vmul.f32 1.0, %v1137
    %v1139 = vtanh.pop %v1100
    %v1140 = vmul.f32 %v1123, %v938
    %1142 = vrot.lane.b32.xlu0 %v1139, 64
    %v1143 = vpop.permute.xlu0 %1142
    %v1145 = vmul.f32 %v1123, %v1143
    %1147 = vrot.lane.b32.xlu0 %v1145, 64
    %v1148 = vpop.permute.xlu0 %1147
    %v1150 = vadd.f32 %v1140, %v1148
    %v1151 = vtanh.pop %v1150
    %1153 = vrot.lane.b32.xlu0 %v1151, 64
    %v1154 = vpop.permute.xlu0 %1153
    %v1156 = vmul.f32 %v1138, %v1154
    %v1158 = vsel %vm422, %v1045, 0
    %1160 = vmatpush.msra.mxu0 0.0
    %1161 = vmatpush.msra.mxu0 0.0
    %1162 = vmatpush.msra.mxu0 0.0
    %1163 = vmatpush.msra.mxu0 0.0
    %1164 = vmatpush.msra.mxu0 0.0
    %1165 = vmatpush.msra.mxu0 0.0
    %1166 = vmatpush.msra.mxu0 0.0
    %1167 = vmatpush.msra.mxu0 0.0
    %1168 = vmatpush.msra.mxu0 %v410
    %1169 = vmatpush.msra.mxu0 %v408
    %1170 = vmatpush.msra.mxu0 %v406
    %1171 = vmatpush.msra.mxu0 %v404
    %1172 = vmatpush.msra.mxu0 %v402
    %1173 = vmatpush.msra.mxu0 %v400
    %1174 = vmatpush.msra.mxu0 %v398
    %1175 = vmatpush.msra.mxu0 %v396
    %1176 = vmatmul.f32.gmra.mxu0 %v1158
    %v1177 = vpop.f32.mrf.mxu0
    %v1178 = vadd.f32 0.0, %v1177
    %1179 = vdwg.mxu0
    %1180 = vmatpush.msra.mxu0 0.0
    %1181 = vmatpush.msra.mxu0 0.0
    %1182 = vmatpush.msra.mxu0 0.0
    %1183 = vmatpush.msra.mxu0 0.0
    %1184 = vmatpush.msra.mxu0 0.0
    %1185 = vmatpush.msra.mxu0 0.0
    %1186 = vmatpush.msra.mxu0 0.0
    %1187 = vmatpush.msra.mxu0 0.0
    %1188 = vmatpush.msra.mxu0 %v411
    %1189 = vmatpush.msra.mxu0 %v409
    %1190 = vmatpush.msra.mxu0 %v407
    %1191 = vmatpush.msra.mxu0 %v405
    %1192 = vmatpush.msra.mxu0 %v403
    %1193 = vmatpush.msra.mxu0 %v401
    %1194 = vmatpush.msra.mxu0 %v399
    %1195 = vmatpush.msra.mxu0 %v397
    %1196 = vmatmul.f32.gmra.mxu0 %v1158
    %v1197 = vpop.f32.mrf.mxu0
    %v1198 = vadd.f32 0.0, %v1197
    %1199 = vdwg.mxu0
    %v1200 = vadd.f32 %v1054, %v1178
    %v1201 = vadd.f32 %v1055, %v1198
    %v1202 = vxor.u32 %v1200, 2147483648
    %v1203 = vxor.u32 %v1201, 2147483648
    %v1204 = vmul.f32 %v1202, 1.442695
    %v1205 = vpow.pop %v1204
    %v1206 = vmul.f32 %v1203, 1.442695
    %v1207 = vpow.pop %v1206
    %v1208 = vadd.f32 %v1205, 1.0
    %v1209 = vadd.f32 %v1207, 1.0
    %v1210 = vrcp.pop %v1208
    %v1211 = vmul.f32 %v1208, %v1210
    %v1212 = vsub.f32 1.0, %v1211
    %v1213 = vmul.f32 %v1210, %v1212
    %v1214 = vadd.f32 %v1210, %v1213
    %vm1215 = vweird.f32 %v1208
    %vm1216 = vweird.f32 %v1210
    %vm1217 = vmor %vm1215, %vm1216
    %v1218 = vsel %vm1217, %v1210, %v1214
    %v1219 = vand.u32 2147483647, %v1208
    %vm1220 = vcmp.eq.f32.partialorder %v1219, 8.507059e+37
    %v1221 = vand.u32 %v1208, 2147483648
    %v1222 = vor.u32 1.1754944e-38, %v1221
    %v1223 = vsel %vm1220, %v1222, %v1218
    %v1224 = vmul.f32 1.0, %v1223
    %v1225 = vrcp.pop %v1209
    %v1226 = vmul.f32 %v1209, %v1225
    %v1227 = vsub.f32 1.0, %v1226
    %v1228 = vmul.f32 %v1225, %v1227
    %v1229 = vadd.f32 %v1225, %v1228
    %vm1230 = vweird.f32 %v1209
    %vm1231 = vweird.f32 %v1225
    %vm1232 = vmor %vm1230, %vm1231
    %v1233 = vsel %vm1232, %v1225, %v1229
    %v1234 = vand.u32 2147483647, %v1209
    %vm1235 = vcmp.eq.f32.partialorder %v1234, 8.507059e+37
    %v1236 = vand.u32 %v1209, 2147483648
    %v1237 = vor.u32 1.1754944e-38, %v1236
    %v1238 = vsel %vm1235, %v1237, %v1233
    %v1239 = vmul.f32 1.0, %v1238
    %v1240 = vtanh.pop %v1201
    %v1241 = vmul.f32 %v1224, %v1039
    %1243 = vrot.lane.b32.xlu0 %v1240, 64
    %v1244 = vpop.permute.xlu0 %1243
    %v1246 = vmul.f32 %v1224, %v1244
    %1248 = vrot.lane.b32.xlu0 %v1246, 64
    %v1249 = vpop.permute.xlu0 %1248
    %v1251 = vadd.f32 %v1241, %v1249
    %v1252 = vtanh.pop %v1251
    %1254 = vrot.lane.b32.xlu0 %v1252, 64
    %v1255 = vpop.permute.xlu0 %1254
    %v1257 = vmul.f32 %v1239, %v1255
    %v1258 = vld [vmem:[%s1053] sm:$0xff]
    %v1259 = vld [vmem:[%s1053 + $0x8] sm:$0xff]
    %v1260 = vld [vmem:[%s1048 + $0x10] sm:$0xff]
    %v1261 = vld [vmem:[%s1048 + $0x18] sm:$0xff]
    %v1263 = vsel %vm422, %v1156, 0
    %1265 = vmatpush.msra.mxu0 0.0
    %1266 = vmatpush.msra.mxu0 0.0
    %1267 = vmatpush.msra.mxu0 0.0
    %1268 = vmatpush.msra.mxu0 0.0
    %1269 = vmatpush.msra.mxu0 0.0
    %1270 = vmatpush.msra.mxu0 0.0
    %1271 = vmatpush.msra.mxu0 0.0
    %1272 = vmatpush.msra.mxu0 0.0
    %1273 = vmatpush.msra.mxu0 %v394
    %1274 = vmatpush.msra.mxu0 %v392
    %1275 = vmatpush.msra.mxu0 %v390
    %1276 = vmatpush.msra.mxu0 %v388
    %1277 = vmatpush.msra.mxu0 %v386
    %1278 = vmatpush.msra.mxu0 %v384
    %1279 = vmatpush.msra.mxu0 %v382
    %1280 = vmatpush.msra.mxu0 %v380
    %1281 = vmatmul.f32.gmra.mxu0 %v1263
    %v1282 = vpop.f32.mrf.mxu0
    %v1283 = vadd.f32 0.0, %v1282
    %1284 = vdwg.mxu0
    %1285 = vmatpush.msra.mxu0 0.0
    %1286 = vmatpush.msra.mxu0 0.0
    %1287 = vmatpush.msra.mxu0 0.0
    %1288 = vmatpush.msra.mxu0 0.0
    %1289 = vmatpush.msra.mxu0 0.0
    %1290 = vmatpush.msra.mxu0 0.0
    %1291 = vmatpush.msra.mxu0 0.0
    %1292 = vmatpush.msra.mxu0 0.0
    %1293 = vmatpush.msra.mxu0 %v395
    %1294 = vmatpush.msra.mxu0 %v393
    %1295 = vmatpush.msra.mxu0 %v391
    %1296 = vmatpush.msra.mxu0 %v389
    %1297 = vmatpush.msra.mxu0 %v387
    %1298 = vmatpush.msra.mxu0 %v385
    %1299 = vmatpush.msra.mxu0 %v383
    %1300 = vmatpush.msra.mxu0 %v381
    %1301 = vmatmul.f32.gmra.mxu0 %v1263
    %v1302 = vpop.f32.mrf.mxu0
    %v1303 = vadd.f32 0.0, %v1302
    %1304 = vdwg.mxu0
    %v1305 = vadd.f32 %v1258, %v1283
    %v1306 = vadd.f32 %v1259, %v1303
    %v1307 = vxor.u32 %v1305, 2147483648
    %v1308 = vxor.u32 %v1306, 2147483648
    %v1309 = vmul.f32 %v1307, 1.442695
    %v1310 = vpow.pop %v1309
    %v1311 = vmul.f32 %v1308, 1.442695
    %v1312 = vpow.pop %v1311
    %v1313 = vadd.f32 %v1310, 1.0
    %v1314 = vadd.f32 %v1312, 1.0
    %v1315 = vrcp.pop %v1313
    %v1316 = vmul.f32 %v1313, %v1315
    %v1317 = vsub.f32 1.0, %v1316
    %v1318 = vmul.f32 %v1315, %v1317
    %v1319 = vadd.f32 %v1315, %v1318
    %vm1320 = vweird.f32 %v1313
    %vm1321 = vweird.f32 %v1315
    %vm1322 = vmor %vm1320, %vm1321
    %v1323 = vsel %vm1322, %v1315, %v1319
    %v1324 = vand.u32 2147483647, %v1313
    %vm1325 = vcmp.eq.f32.partialorder %v1324, 8.507059e+37
    %v1326 = vand.u32 %v1313, 2147483648
    %v1327 = vor.u32 1.1754944e-38, %v1326
    %v1328 = vsel %vm1325, %v1327, %v1323
    %v1329 = vmul.f32 1.0, %v1328
    %v1330 = vrcp.pop %v1314
    %v1331 = vmul.f32 %v1314, %v1330
    %v1332 = vsub.f32 1.0, %v1331
    %v1333 = vmul.f32 %v1330, %v1332
    %v1334 = vadd.f32 %v1330, %v1333
    %vm1335 = vweird.f32 %v1314
    %vm1336 = vweird.f32 %v1330
    %vm1337 = vmor %vm1335, %vm1336
    %v1338 = vsel %vm1337, %v1330, %v1334
    %v1339 = vand.u32 2147483647, %v1314
    %vm1340 = vcmp.eq.f32.partialorder %v1339, 8.507059e+37
    %v1341 = vand.u32 %v1314, 2147483648
    %v1342 = vor.u32 1.1754944e-38, %v1341
    %v1343 = vsel %vm1340, %v1342, %v1338
    %v1344 = vmul.f32 1.0, %v1343
    %v1345 = vtanh.pop %v1306
    %v1346 = vmul.f32 %v1329, %v1150
    %1348 = vrot.lane.b32.xlu0 %v1345, 64
    %v1349 = vpop.permute.xlu0 %1348
    %v1351 = vmul.f32 %v1329, %v1349
    %1353 = vrot.lane.b32.xlu0 %v1351, 64
    %v1354 = vpop.permute.xlu0 %1353
    %v1356 = vadd.f32 %v1346, %v1354
    %v1357 = vtanh.pop %v1356
    %1359 = vrot.lane.b32.xlu0 %v1357, 64
    %v1360 = vpop.permute.xlu0 %1359
    %v1362 = vmul.f32 %v1344, %v1360
    %v1364 = vsel %vm422, %v1257, 0
    %1366 = vmatpush.msra.mxu0 0.0
    %1367 = vmatpush.msra.mxu0 0.0
    %1368 = vmatpush.msra.mxu0 0.0
    %1369 = vmatpush.msra.mxu0 0.0
    %1370 = vmatpush.msra.mxu0 0.0
    %1371 = vmatpush.msra.mxu0 0.0
    %1372 = vmatpush.msra.mxu0 0.0
    %1373 = vmatpush.msra.mxu0 0.0
    %1374 = vmatpush.msra.mxu0 %v410
    %1375 = vmatpush.msra.mxu0 %v408
    %1376 = vmatpush.msra.mxu0 %v406
    %1377 = vmatpush.msra.mxu0 %v404
    %1378 = vmatpush.msra.mxu0 %v402
    %1379 = vmatpush.msra.mxu0 %v400
    %1380 = vmatpush.msra.mxu0 %v398
    %1381 = vmatpush.msra.mxu0 %v396
    %1382 = vmatmul.f32.gmra.mxu0 %v1364
    %v1383 = vpop.f32.mrf.mxu0
    %v1384 = vadd.f32 0.0, %v1383
    %1385 = vdwg.mxu0
    %1386 = vmatpush.msra.mxu0 0.0
    %1387 = vmatpush.msra.mxu0 0.0
    %1388 = vmatpush.msra.mxu0 0.0
    %1389 = vmatpush.msra.mxu0 0.0
    %1390 = vmatpush.msra.mxu0 0.0
    %1391 = vmatpush.msra.mxu0 0.0
    %1392 = vmatpush.msra.mxu0 0.0
    %1393 = vmatpush.msra.mxu0 0.0
    %1394 = vmatpush.msra.mxu0 %v411
    %1395 = vmatpush.msra.mxu0 %v409
    %1396 = vmatpush.msra.mxu0 %v407
    %1397 = vmatpush.msra.mxu0 %v405
    %1398 = vmatpush.msra.mxu0 %v403
    %1399 = vmatpush.msra.mxu0 %v401
    %1400 = vmatpush.msra.mxu0 %v399
    %1401 = vmatpush.msra.mxu0 %v397
    %1402 = vmatmul.f32.gmra.mxu0 %v1364
    %v1403 = vpop.f32.mrf.mxu0
    %v1404 = vadd.f32 0.0, %v1403
    %1405 = vdwg.mxu0
    %v1406 = vadd.f32 %v1260, %v1384
    %v1407 = vadd.f32 %v1261, %v1404
    %v1408 = vxor.u32 %v1406, 2147483648
    %v1409 = vxor.u32 %v1407, 2147483648
    %v1410 = vmul.f32 %v1408, 1.442695
    %v1411 = vpow.pop %v1410
    %v1412 = vmul.f32 %v1409, 1.442695
    %v1413 = vpow.pop %v1412
    %v1414 = vadd.f32 %v1411, 1.0
    %v1415 = vadd.f32 %v1413, 1.0
    %v1416 = vrcp.pop %v1414
    %v1417 = vmul.f32 %v1414, %v1416
    %v1418 = vsub.f32 1.0, %v1417
    %v1419 = vmul.f32 %v1416, %v1418
    %v1420 = vadd.f32 %v1416, %v1419
    %vm1421 = vweird.f32 %v1414
    %vm1422 = vweird.f32 %v1416
    %vm1423 = vmor %vm1421, %vm1422
    %v1424 = vsel %vm1423, %v1416, %v1420
    %v1425 = vand.u32 2147483647, %v1414
    %vm1426 = vcmp.eq.f32.partialorder %v1425, 8.507059e+37
    %v1427 = vand.u32 %v1414, 2147483648
    %v1428 = vor.u32 1.1754944e-38, %v1427
    %v1429 = vsel %vm1426, %v1428, %v1424
    %v1430 = vmul.f32 1.0, %v1429
    %v1431 = vrcp.pop %v1415
    %v1432 = vmul.f32 %v1415, %v1431
    %v1433 = vsub.f32 1.0, %v1432
    %v1434 = vmul.f32 %v1431, %v1433
    %v1435 = vadd.f32 %v1431, %v1434
    %vm1436 = vweird.f32 %v1415
    %vm1437 = vweird.f32 %v1431
    %vm1438 = vmor %vm1436, %vm1437
    %v1439 = vsel %vm1438, %v1431, %v1435
    %v1440 = vand.u32 2147483647, %v1415
    %vm1441 = vcmp.eq.f32.partialorder %v1440, 8.507059e+37
    %v1442 = vand.u32 %v1415, 2147483648
    %v1443 = vor.u32 1.1754944e-38, %v1442
    %v1444 = vsel %vm1441, %v1443, %v1439
    %v1445 = vmul.f32 1.0, %v1444
    %v1446 = vtanh.pop %v1407
    %v1447 = vmul.f32 %v1430, %v1251
    %1449 = vrot.lane.b32.xlu0 %v1446, 64
    %v1450 = vpop.permute.xlu0 %1449
    %v1452 = vmul.f32 %v1430, %v1450
    %1454 = vrot.lane.b32.xlu0 %v1452, 64
    %v1455 = vpop.permute.xlu0 %1454
    %v1457 = vadd.f32 %v1447, %v1455
    %v1458 = vtanh.pop %v1457
    %1460 = vrot.lane.b32.xlu0 %v1458, 64
    %v1461 = vpop.permute.xlu0 %1460
    %v1463 = vmul.f32 %v1445, %v1461
    %v1464 = vld [vmem:[%s841] sm:$0xff]
    %v1465 = vld [vmem:[%s841 + $0x8] sm:$0xff]
    %v1466 = vld [vmem:[%s836 + $0x10] sm:$0xff]
    %v1467 = vld [vmem:[%s836 + $0x18] sm:$0xff]
    %v1469 = vsel %vm422, %v1362, 0
    %1471 = vmatpush.msra.mxu0 0.0
    %1472 = vmatpush.msra.mxu0 0.0
    %1473 = vmatpush.msra.mxu0 0.0
    %1474 = vmatpush.msra.mxu0 0.0
    %1475 = vmatpush.msra.mxu0 0.0
    %1476 = vmatpush.msra.mxu0 0.0
    %1477 = vmatpush.msra.mxu0 0.0
    %1478 = vmatpush.msra.mxu0 0.0
    %1479 = vmatpush.msra.mxu0 %v394
    %1480 = vmatpush.msra.mxu0 %v392
    %1481 = vmatpush.msra.mxu0 %v390
    %1482 = vmatpush.msra.mxu0 %v388
    %1483 = vmatpush.msra.mxu0 %v386
    %1484 = vmatpush.msra.mxu0 %v384
    %1485 = vmatpush.msra.mxu0 %v382
    %1486 = vmatpush.msra.mxu0 %v380
    %1487 = vmatmul.f32.gmra.mxu0 %v1469
    %v1488 = vpop.f32.mrf.mxu0
    %v1489 = vadd.f32 0.0, %v1488
    %1490 = vdwg.mxu0
    %1491 = vmatpush.msra.mxu0 0.0
    %1492 = vmatpush.msra.mxu0 0.0
    %1493 = vmatpush.msra.mxu0 0.0
    %1494 = vmatpush.msra.mxu0 0.0
    %1495 = vmatpush.msra.mxu0 0.0
    %1496 = vmatpush.msra.mxu0 0.0
    %1497 = vmatpush.msra.mxu0 0.0
    %1498 = vmatpush.msra.mxu0 0.0
    %1499 = vmatpush.msra.mxu0 %v395
    %1500 = vmatpush.msra.mxu0 %v393
    %1501 = vmatpush.msra.mxu0 %v391
    %1502 = vmatpush.msra.mxu0 %v389
    %1503 = vmatpush.msra.mxu0 %v387
    %1504 = vmatpush.msra.mxu0 %v385
    %1505 = vmatpush.msra.mxu0 %v383
    %1506 = vmatpush.msra.mxu0 %v381
    %1507 = vmatmul.f32.gmra.mxu0 %v1469
    %v1508 = vpop.f32.mrf.mxu0
    %v1509 = vadd.f32 0.0, %v1508
    %1510 = vdwg.mxu0
    %v1511 = vadd.f32 %v1464, %v1489
    %v1512 = vadd.f32 %v1465, %v1509
    %v1513 = vxor.u32 %v1511, 2147483648
    %v1514 = vxor.u32 %v1512, 2147483648
    %v1515 = vmul.f32 %v1513, 1.442695
    %v1516 = vpow.pop %v1515
    %v1517 = vmul.f32 %v1514, 1.442695
    %v1518 = vpow.pop %v1517
    %v1519 = vadd.f32 %v1516, 1.0
    %v1520 = vadd.f32 %v1518, 1.0
    %v1521 = vrcp.pop %v1519
    %v1522 = vmul.f32 %v1519, %v1521
    %v1523 = vsub.f32 1.0, %v1522
    %v1524 = vmul.f32 %v1521, %v1523
    %v1525 = vadd.f32 %v1521, %v1524
    %vm1526 = vweird.f32 %v1519
    %vm1527 = vweird.f32 %v1521
    %vm1528 = vmor %vm1526, %vm1527
    %v1529 = vsel %vm1528, %v1521, %v1525
    %v1530 = vand.u32 2147483647, %v1519
    %vm1531 = vcmp.eq.f32.partialorder %v1530, 8.507059e+37
    %v1532 = vand.u32 %v1519, 2147483648
    %v1533 = vor.u32 1.1754944e-38, %v1532
    %v1534 = vsel %vm1531, %v1533, %v1529
    %v1535 = vmul.f32 1.0, %v1534
    %v1536 = vrcp.pop %v1520
    %v1537 = vmul.f32 %v1520, %v1536
    %v1538 = vsub.f32 1.0, %v1537
    %v1539 = vmul.f32 %v1536, %v1538
    %v1540 = vadd.f32 %v1536, %v1539
    %vm1541 = vweird.f32 %v1520
    %vm1542 = vweird.f32 %v1536
    %vm1543 = vmor %vm1541, %vm1542
    %v1544 = vsel %vm1543, %v1536, %v1540
    %v1545 = vand.u32 2147483647, %v1520
    %vm1546 = vcmp.eq.f32.partialorder %v1545, 8.507059e+37
    %v1547 = vand.u32 %v1520, 2147483648
    %v1548 = vor.u32 1.1754944e-38, %v1547
    %v1549 = vsel %vm1546, %v1548, %v1544
    %v1550 = vmul.f32 1.0, %v1549
    %v1551 = vtanh.pop %v1512
    %v1552 = vmul.f32 %v1535, %v1356
    %1554 = vrot.lane.b32.xlu0 %v1551, 64
    %v1555 = vpop.permute.xlu0 %1554
    %v1557 = vmul.f32 %v1535, %v1555
    %1559 = vrot.lane.b32.xlu0 %v1557, 64
    %v1560 = vpop.permute.xlu0 %1559
    %v1562 = vadd.f32 %v1552, %v1560
    %v1563 = vtanh.pop %v1562
    %1565 = vrot.lane.b32.xlu0 %v1563, 64
    %v1566 = vpop.permute.xlu0 %1565
    %v1568 = vmul.f32 %v1550, %v1566
    %v1570 = vsel %vm422, %v1463, 0
    %1572 = vmatpush.msra.mxu0 0.0
    %1573 = vmatpush.msra.mxu0 0.0
    %1574 = vmatpush.msra.mxu0 0.0
    %1575 = vmatpush.msra.mxu0 0.0
    %1576 = vmatpush.msra.mxu0 0.0
    %1577 = vmatpush.msra.mxu0 0.0
    %1578 = vmatpush.msra.mxu0 0.0
    %1579 = vmatpush.msra.mxu0 0.0
    %1580 = vmatpush.msra.mxu0 %v410
    %1581 = vmatpush.msra.mxu0 %v408
    %1582 = vmatpush.msra.mxu0 %v406
    %1583 = vmatpush.msra.mxu0 %v404
    %1584 = vmatpush.msra.mxu0 %v402
    %1585 = vmatpush.msra.mxu0 %v400
    %1586 = vmatpush.msra.mxu0 %v398
    %1587 = vmatpush.msra.mxu0 %v396
    %1588 = vmatmul.f32.gmra.mxu0 %v1570
    %v1589 = vpop.f32.mrf.mxu0
    %v1590 = vadd.f32 0.0, %v1589
    %1591 = vdwg.mxu0
    %1592 = vmatpush.msra.mxu0 0.0
    %1593 = vmatpush.msra.mxu0 0.0
    %1594 = vmatpush.msra.mxu0 0.0
    %1595 = vmatpush.msra.mxu0 0.0
    %1596 = vmatpush.msra.mxu0 0.0
    %1597 = vmatpush.msra.mxu0 0.0
    %1598 = vmatpush.msra.mxu0 0.0
    %1599 = vmatpush.msra.mxu0 0.0
    %1600 = vmatpush.msra.mxu0 %v411
    %1601 = vmatpush.msra.mxu0 %v409
    %1602 = vmatpush.msra.mxu0 %v407
    %1603 = vmatpush.msra.mxu0 %v405
    %1604 = vmatpush.msra.mxu0 %v403
    %1605 = vmatpush.msra.mxu0 %v401
    %1606 = vmatpush.msra.mxu0 %v399
    %1607 = vmatpush.msra.mxu0 %v397
    %1608 = vmatmul.f32.gmra.mxu0 %v1570
    %v1609 = vpop.f32.mrf.mxu0
    %v1610 = vadd.f32 0.0, %v1609
    %1611 = vdwg.mxu0
    %v1612 = vadd.f32 %v1466, %v1590
    %v1613 = vadd.f32 %v1467, %v1610
    %v1614 = vxor.u32 %v1612, 2147483648
    %v1615 = vxor.u32 %v1613, 2147483648
    %v1616 = vmul.f32 %v1614, 1.442695
    %v1617 = vpow.pop %v1616
    %v1618 = vmul.f32 %v1615, 1.442695
    %v1619 = vpow.pop %v1618
    %v1620 = vadd.f32 %v1617, 1.0
    %v1621 = vadd.f32 %v1619, 1.0
    %v1622 = vrcp.pop %v1620
    %v1623 = vmul.f32 %v1620, %v1622
    %v1624 = vsub.f32 1.0, %v1623
    %v1625 = vmul.f32 %v1622, %v1624
    %v1626 = vadd.f32 %v1622, %v1625
    %vm1627 = vweird.f32 %v1620
    %vm1628 = vweird.f32 %v1622
    %vm1629 = vmor %vm1627, %vm1628
    %v1630 = vsel %vm1629, %v1622, %v1626
    %v1631 = vand.u32 2147483647, %v1620
    %vm1632 = vcmp.eq.f32.partialorder %v1631, 8.507059e+37
    %v1633 = vand.u32 %v1620, 2147483648
    %v1634 = vor.u32 1.1754944e-38, %v1633
    %v1635 = vsel %vm1632, %v1634, %v1630
    %v1636 = vmul.f32 1.0, %v1635
    %v1637 = vrcp.pop %v1621
    %v1638 = vmul.f32 %v1621, %v1637
    %v1639 = vsub.f32 1.0, %v1638
    %v1640 = vmul.f32 %v1637, %v1639
    %v1641 = vadd.f32 %v1637, %v1640
    %vm1642 = vweird.f32 %v1621
    %vm1643 = vweird.f32 %v1637
    %vm1644 = vmor %vm1642, %vm1643
    %v1645 = vsel %vm1644, %v1637, %v1641
    %v1646 = vand.u32 2147483647, %v1621
    %vm1647 = vcmp.eq.f32.partialorder %v1646, 8.507059e+37
    %v1648 = vand.u32 %v1621, 2147483648
    %v1649 = vor.u32 1.1754944e-38, %v1648
    %v1650 = vsel %vm1647, %v1649, %v1645
    %v1651 = vmul.f32 1.0, %v1650
    %v1652 = vtanh.pop %v1613
    %v1653 = vmul.f32 %v1636, %v1457
    %1655 = vrot.lane.b32.xlu0 %v1652, 64
    %v1656 = vpop.permute.xlu0 %1655
    %v1658 = vmul.f32 %v1636, %v1656
    %1660 = vrot.lane.b32.xlu0 %v1658, 64
    %v1661 = vpop.permute.xlu0 %1660
    %v1663 = vadd.f32 %v1653, %v1661
    %v1664 = vtanh.pop %v1663
    %1666 = vrot.lane.b32.xlu0 %v1664, 64
    %v1667 = vpop.permute.xlu0 %1666
    %v1669 = vmul.f32 %v1651, %v1667
    %v1670 = vld [vmem:[%s629] sm:$0xff]
    %v1671 = vld [vmem:[%s629 + $0x8] sm:$0xff]
    %v1672 = vld [vmem:[%s624 + $0x10] sm:$0xff]
    %v1673 = vld [vmem:[%s624 + $0x18] sm:$0xff]
    %v1675 = vsel %vm422, %v1568, 0
    %1677 = vmatpush.msra.mxu0 0.0
    %1678 = vmatpush.msra.mxu0 0.0
    %1679 = vmatpush.msra.mxu0 0.0
    %1680 = vmatpush.msra.mxu0 0.0
    %1681 = vmatpush.msra.mxu0 0.0
    %1682 = vmatpush.msra.mxu0 0.0
    %1683 = vmatpush.msra.mxu0 0.0
    %1684 = vmatpush.msra.mxu0 0.0
    %1685 = vmatpush.msra.mxu0 %v394
    %1686 = vmatpush.msra.mxu0 %v392
    %1687 = vmatpush.msra.mxu0 %v390
    %1688 = vmatpush.msra.mxu0 %v388
    %1689 = vmatpush.msra.mxu0 %v386
    %1690 = vmatpush.msra.mxu0 %v384
    %1691 = vmatpush.msra.mxu0 %v382
    %1692 = vmatpush.msra.mxu0 %v380
    %1693 = vmatmul.f32.gmra.mxu0 %v1675
    %v1694 = vpop.f32.mrf.mxu0
    %v1695 = vadd.f32 0.0, %v1694
    %1696 = vdwg.mxu0
    %1697 = vmatpush.msra.mxu0 0.0
    %1698 = vmatpush.msra.mxu0 0.0
    %1699 = vmatpush.msra.mxu0 0.0
    %1700 = vmatpush.msra.mxu0 0.0
    %1701 = vmatpush.msra.mxu0 0.0
    %1702 = vmatpush.msra.mxu0 0.0
    %1703 = vmatpush.msra.mxu0 0.0
    %1704 = vmatpush.msra.mxu0 0.0
    %1705 = vmatpush.msra.mxu0 %v395
    %1706 = vmatpush.msra.mxu0 %v393
    %1707 = vmatpush.msra.mxu0 %v391
    %1708 = vmatpush.msra.mxu0 %v389
    %1709 = vmatpush.msra.mxu0 %v387
    %1710 = vmatpush.msra.mxu0 %v385
    %1711 = vmatpush.msra.mxu0 %v383
    %1712 = vmatpush.msra.mxu0 %v381
    %1713 = vmatmul.f32.gmra.mxu0 %v1675
    %v1714 = vpop.f32.mrf.mxu0
    %v1715 = vadd.f32 0.0, %v1714
    %1716 = vdwg.mxu0
    %v1717 = vadd.f32 %v1670, %v1695
    %v1718 = vadd.f32 %v1671, %v1715
    %v1719 = vxor.u32 %v1717, 2147483648
    %v1720 = vxor.u32 %v1718, 2147483648
    %v1721 = vmul.f32 %v1719, 1.442695
    %v1722 = vpow.pop %v1721
    %v1723 = vmul.f32 %v1720, 1.442695
    %v1724 = vpow.pop %v1723
    %v1725 = vadd.f32 %v1722, 1.0
    %v1726 = vadd.f32 %v1724, 1.0
    %v1727 = vrcp.pop %v1725
    %v1728 = vmul.f32 %v1725, %v1727
    %v1729 = vsub.f32 1.0, %v1728
    %v1730 = vmul.f32 %v1727, %v1729
    %v1731 = vadd.f32 %v1727, %v1730
    %vm1732 = vweird.f32 %v1725
    %vm1733 = vweird.f32 %v1727
    %vm1734 = vmor %vm1732, %vm1733
    %v1735 = vsel %vm1734, %v1727, %v1731
    %v1736 = vand.u32 2147483647, %v1725
    %vm1737 = vcmp.eq.f32.partialorder %v1736, 8.507059e+37
    %v1738 = vand.u32 %v1725, 2147483648
    %v1739 = vor.u32 1.1754944e-38, %v1738
    %v1740 = vsel %vm1737, %v1739, %v1735
    %v1741 = vmul.f32 1.0, %v1740
    %v1742 = vrcp.pop %v1726
    %v1743 = vmul.f32 %v1726, %v1742
    %v1744 = vsub.f32 1.0, %v1743
    %v1745 = vmul.f32 %v1742, %v1744
    %v1746 = vadd.f32 %v1742, %v1745
    %vm1747 = vweird.f32 %v1726
    %vm1748 = vweird.f32 %v1742
    %vm1749 = vmor %vm1747, %vm1748
    %v1750 = vsel %vm1749, %v1742, %v1746
    %v1751 = vand.u32 2147483647, %v1726
    %vm1752 = vcmp.eq.f32.partialorder %v1751, 8.507059e+37
    %v1753 = vand.u32 %v1726, 2147483648
    %v1754 = vor.u32 1.1754944e-38, %v1753
    %v1755 = vsel %vm1752, %v1754, %v1750
    %v1756 = vmul.f32 1.0, %v1755
    %v1757 = vtanh.pop %v1718
    %v1758 = vmul.f32 %v1741, %v1562
    %1760 = vrot.lane.b32.xlu0 %v1757, 64
    %v1761 = vpop.permute.xlu0 %1760
    %v1763 = vmul.f32 %v1741, %v1761
    %1765 = vrot.lane.b32.xlu0 %v1763, 64
    %v1766 = vpop.permute.xlu0 %1765
    %v1768 = vadd.f32 %v1758, %v1766
    %v1769 = vtanh.pop %v1768
    %1771 = vrot.lane.b32.xlu0 %v1769, 64
    %v1772 = vpop.permute.xlu0 %1771
    %v1774 = vmul.f32 %v1756, %v1772
    %v1776 = vsel %vm422, %v1669, 0
    %1778 = vmatpush.msra.mxu0 0.0
    %1779 = vmatpush.msra.mxu0 0.0
    %1780 = vmatpush.msra.mxu0 0.0
    %1781 = vmatpush.msra.mxu0 0.0
    %1782 = vmatpush.msra.mxu0 0.0
    %1783 = vmatpush.msra.mxu0 0.0
    %1784 = vmatpush.msra.mxu0 0.0
    %1785 = vmatpush.msra.mxu0 0.0
    %1786 = vmatpush.msra.mxu0 %v410
    %1787 = vmatpush.msra.mxu0 %v408
    %1788 = vmatpush.msra.mxu0 %v406
    %1789 = vmatpush.msra.mxu0 %v404
    %1790 = vmatpush.msra.mxu0 %v402
    %1791 = vmatpush.msra.mxu0 %v400
    %1792 = vmatpush.msra.mxu0 %v398
    %1793 = vmatpush.msra.mxu0 %v396
    %1794 = vmatmul.f32.gmra.mxu0 %v1776
    %v1795 = vpop.f32.mrf.mxu0
    %v1796 = vadd.f32 0.0, %v1795
    %1797 = vdwg.mxu0
    %1798 = vmatpush.msra.mxu0 0.0
    %1799 = vmatpush.msra.mxu0 0.0
    %1800 = vmatpush.msra.mxu0 0.0
    %1801 = vmatpush.msra.mxu0 0.0
    %1802 = vmatpush.msra.mxu0 0.0
    %1803 = vmatpush.msra.mxu0 0.0
    %1804 = vmatpush.msra.mxu0 0.0
    %1805 = vmatpush.msra.mxu0 0.0
    %1806 = vmatpush.msra.mxu0 %v411
    %1807 = vmatpush.msra.mxu0 %v409
    %1808 = vmatpush.msra.mxu0 %v407
    %1809 = vmatpush.msra.mxu0 %v405
    %1810 = vmatpush.msra.mxu0 %v403
    %1811 = vmatpush.msra.mxu0 %v401
    %1812 = vmatpush.msra.mxu0 %v399
    %1813 = vmatpush.msra.mxu0 %v397
    %1814 = vmatmul.f32.gmra.mxu0 %v1776
    %v1815 = vpop.f32.mrf.mxu0
    %v1816 = vadd.f32 0.0, %v1815
    %1817 = vdwg.mxu0
    %v1818 = vadd.f32 %v1672, %v1796
    %v1819 = vadd.f32 %v1673, %v1816
    %v1820 = vxor.u32 %v1818, 2147483648
    %v1821 = vxor.u32 %v1819, 2147483648
    %v1822 = vmul.f32 %v1820, 1.442695
    %v1823 = vpow.pop %v1822
    %v1824 = vmul.f32 %v1821, 1.442695
    %v1825 = vpow.pop %v1824
    %v1826 = vadd.f32 %v1823, 1.0
    %v1827 = vadd.f32 %v1825, 1.0
    %v1828 = vrcp.pop %v1826
    %v1829 = vmul.f32 %v1826, %v1828
    %v1830 = vsub.f32 1.0, %v1829
    %v1831 = vmul.f32 %v1828, %v1830
    %v1832 = vadd.f32 %v1828, %v1831
    %vm1833 = vweird.f32 %v1826
    %vm1834 = vweird.f32 %v1828
    %vm1835 = vmor %vm1833, %vm1834
    %v1836 = vsel %vm1835, %v1828, %v1832
    %v1837 = vand.u32 2147483647, %v1826
    %vm1838 = vcmp.eq.f32.partialorder %v1837, 8.507059e+37
    %v1839 = vand.u32 %v1826, 2147483648
    %v1840 = vor.u32 1.1754944e-38, %v1839
    %v1841 = vsel %vm1838, %v1840, %v1836
    %v1842 = vmul.f32 1.0, %v1841
    %v1843 = vrcp.pop %v1827
    %v1844 = vmul.f32 %v1827, %v1843
    %v1845 = vsub.f32 1.0, %v1844
    %v1846 = vmul.f32 %v1843, %v1845
    %v1847 = vadd.f32 %v1843, %v1846
    %vm1848 = vweird.f32 %v1827
    %vm1849 = vweird.f32 %v1843
    %vm1850 = vmor %vm1848, %vm1849
    %v1851 = vsel %vm1850, %v1843, %v1847
    %v1852 = vand.u32 2147483647, %v1827
    %vm1853 = vcmp.eq.f32.partialorder %v1852, 8.507059e+37
    %v1854 = vand.u32 %v1827, 2147483648
    %v1855 = vor.u32 1.1754944e-38, %v1854
    %v1856 = vsel %vm1853, %v1855, %v1851
    %v1857 = vmul.f32 1.0, %v1856
    %v1858 = vtanh.pop %v1819
    %v1859 = vmul.f32 %v1842, %v1663
    %1861 = vrot.lane.b32.xlu0 %v1858, 64
    %v1862 = vpop.permute.xlu0 %1861
    %v1864 = vmul.f32 %v1842, %v1862
    %1866 = vrot.lane.b32.xlu0 %v1864, 64
    %v1867 = vpop.permute.xlu0 %1866
    %v1869 = vadd.f32 %v1859, %v1867
    %v1870 = vtanh.pop %v1869
    %1872 = vrot.lane.b32.xlu0 %v1870, 64
    %v1873 = vpop.permute.xlu0 %1872
    %v1875 = vmul.f32 %v1857, %v1873
    %v1876 = vld [vmem:[%s419] sm:$0xff]
    %v1877 = vld [vmem:[%s419 + $0x8] sm:$0xff]
    %v1878 = vld [vmem:[%s414 + $0x10] sm:$0xff]
    %v1879 = vld [vmem:[%s414 + $0x18] sm:$0xff]
    %v1881 = vsel %vm422, %v1774, 0
    %1883 = vmatpush.msra.mxu0 0.0
    %1884 = vmatpush.msra.mxu0 0.0
    %1885 = vmatpush.msra.mxu0 0.0
    %1886 = vmatpush.msra.mxu0 0.0
    %1887 = vmatpush.msra.mxu0 0.0
    %1888 = vmatpush.msra.mxu0 0.0
    %1889 = vmatpush.msra.mxu0 0.0
    %1890 = vmatpush.msra.mxu0 0.0
    %1891 = vmatpush.msra.mxu0 %v394
    %1892 = vmatpush.msra.mxu0 %v392
    %1893 = vmatpush.msra.mxu0 %v390
    %1894 = vmatpush.msra.mxu0 %v388
    %1895 = vmatpush.msra.mxu0 %v386
    %1896 = vmatpush.msra.mxu0 %v384
    %1897 = vmatpush.msra.mxu0 %v382
    %1898 = vmatpush.msra.mxu0 %v380
    %1899 = vmatmul.f32.gmra.mxu0 %v1881
    %v1900 = vpop.f32.mrf.mxu0
    %v1901 = vadd.f32 0.0, %v1900
    %1902 = vdwg.mxu0
    %1903 = vmatpush.msra.mxu0 0.0
    %1904 = vmatpush.msra.mxu0 0.0
    %1905 = vmatpush.msra.mxu0 0.0
    %1906 = vmatpush.msra.mxu0 0.0
    %1907 = vmatpush.msra.mxu0 0.0
    %1908 = vmatpush.msra.mxu0 0.0
    %1909 = vmatpush.msra.mxu0 0.0
    %1910 = vmatpush.msra.mxu0 0.0
    %1911 = vmatpush.msra.mxu0 %v395
    %1912 = vmatpush.msra.mxu0 %v393
    %1913 = vmatpush.msra.mxu0 %v391
    %1914 = vmatpush.msra.mxu0 %v389
    %1915 = vmatpush.msra.mxu0 %v387
    %1916 = vmatpush.msra.mxu0 %v385
    %1917 = vmatpush.msra.mxu0 %v383
    %1918 = vmatpush.msra.mxu0 %v381
    %1919 = vmatmul.f32.gmra.mxu0 %v1881
    %v1920 = vpop.f32.mrf.mxu0
    %v1921 = vadd.f32 0.0, %v1920
    %1922 = vdwg.mxu0
    %v1923 = vadd.f32 %v1876, %v1901
    %v1924 = vadd.f32 %v1877, %v1921
    %v1925 = vxor.u32 %v1923, 2147483648
    %v1926 = vxor.u32 %v1924, 2147483648
    %v1927 = vmul.f32 %v1925, 1.442695
    %v1928 = vpow.pop %v1927
    %v1929 = vmul.f32 %v1926, 1.442695
    %v1930 = vpow.pop %v1929
    %v1931 = vadd.f32 %v1928, 1.0
    %v1932 = vadd.f32 %v1930, 1.0
    %v1933 = vrcp.pop %v1931
    %v1934 = vmul.f32 %v1931, %v1933
    %v1935 = vsub.f32 1.0, %v1934
    %v1936 = vmul.f32 %v1933, %v1935
    %v1937 = vadd.f32 %v1933, %v1936
    %vm1938 = vweird.f32 %v1931
    %vm1939 = vweird.f32 %v1933
    %vm1940 = vmor %vm1938, %vm1939
    %v1941 = vsel %vm1940, %v1933, %v1937
    %v1942 = vand.u32 2147483647, %v1931
    %vm1943 = vcmp.eq.f32.partialorder %v1942, 8.507059e+37
    %v1944 = vand.u32 %v1931, 2147483648
    %v1945 = vor.u32 1.1754944e-38, %v1944
    %v1946 = vsel %vm1943, %v1945, %v1941
    %v1947 = vmul.f32 1.0, %v1946
    %v1948 = vrcp.pop %v1932
    %v1949 = vmul.f32 %v1932, %v1948
    %v1950 = vsub.f32 1.0, %v1949
    %v1951 = vmul.f32 %v1948, %v1950
    %v1952 = vadd.f32 %v1948, %v1951
    %vm1953 = vweird.f32 %v1932
    %vm1954 = vweird.f32 %v1948
    %vm1955 = vmor %vm1953, %vm1954
    %v1956 = vsel %vm1955, %v1948, %v1952
    %v1957 = vand.u32 2147483647, %v1932
    %vm1958 = vcmp.eq.f32.partialorder %v1957, 8.507059e+37
    %v1959 = vand.u32 %v1932, 2147483648
    %v1960 = vor.u32 1.1754944e-38, %v1959
    %v1961 = vsel %vm1958, %v1960, %v1956
    %v1962 = vmul.f32 1.0, %v1961
    %v1963 = vtanh.pop %v1924
    %v1964 = vmul.f32 %v1947, %v1768
    %1966 = vrot.lane.b32.xlu0 %v1963, 64
    %v1967 = vpop.permute.xlu0 %1966
    %v1969 = vmul.f32 %v1947, %v1967
    %1971 = vrot.lane.b32.xlu0 %v1969, 64
    %v1972 = vpop.permute.xlu0 %1971
    %v1974 = vadd.f32 %v1964, %v1972
    %v1975 = vtanh.pop %v1974
    %1977 = vrot.lane.b32.xlu0 %v1975, 64
    %v1978 = vpop.permute.xlu0 %1977
    %v1980 = vmul.f32 %v1962, %v1978
    %v1982 = vsel %vm422, %v1875, 0
    %1984 = vmatpush.msra.mxu0 0.0
    %1985 = vmatpush.msra.mxu0 0.0
    %1986 = vmatpush.msra.mxu0 0.0
    %1987 = vmatpush.msra.mxu0 0.0
    %1988 = vmatpush.msra.mxu0 0.0
    %1989 = vmatpush.msra.mxu0 0.0
    %1990 = vmatpush.msra.mxu0 0.0
    %1991 = vmatpush.msra.mxu0 0.0
    %1992 = vmatpush.msra.mxu0 %v410
    %1993 = vmatpush.msra.mxu0 %v408
    %1994 = vmatpush.msra.mxu0 %v406
    %1995 = vmatpush.msra.mxu0 %v404
    %1996 = vmatpush.msra.mxu0 %v402
    %1997 = vmatpush.msra.mxu0 %v400
    %1998 = vmatpush.msra.mxu0 %v398
    %1999 = vmatpush.msra.mxu0 %v396
    %2000 = vmatmul.f32.gmra.mxu0 %v1982
    %v2001 = vpop.f32.mrf.mxu0
    %v2002 = vadd.f32 0.0, %v2001
    %2003 = vdwg.mxu0
    %2004 = vmatpush.msra.mxu0 0.0
    %2005 = vmatpush.msra.mxu0 0.0
    %2006 = vmatpush.msra.mxu0 0.0
    %2007 = vmatpush.msra.mxu0 0.0
    %2008 = vmatpush.msra.mxu0 0.0
    %2009 = vmatpush.msra.mxu0 0.0
    %2010 = vmatpush.msra.mxu0 0.0
    %2011 = vmatpush.msra.mxu0 0.0
    %2012 = vmatpush.msra.mxu0 %v411
    %2013 = vmatpush.msra.mxu0 %v409
    %2014 = vmatpush.msra.mxu0 %v407
    %2015 = vmatpush.msra.mxu0 %v405
    %2016 = vmatpush.msra.mxu0 %v403
    %2017 = vmatpush.msra.mxu0 %v401
    %2018 = vmatpush.msra.mxu0 %v399
    %2019 = vmatpush.msra.mxu0 %v397
    %2020 = vmatmul.f32.gmra.mxu0 %v1982
    %v2021 = vpop.f32.mrf.mxu0
    %v2022 = vadd.f32 0.0, %v2021
    %2023 = vdwg.mxu0
    %v2024 = vadd.f32 %v1878, %v2002
    %v2025 = vadd.f32 %v1879, %v2022
    %v2026 = vxor.u32 %v2024, 2147483648
    %v2027 = vxor.u32 %v2025, 2147483648
    %v2028 = vmul.f32 %v2026, 1.442695
    %v2029 = vpow.pop %v2028
    %v2030 = vmul.f32 %v2027, 1.442695
    %v2031 = vpow.pop %v2030
    %v2032 = vadd.f32 %v2029, 1.0
    %v2033 = vadd.f32 %v2031, 1.0
    %v2034 = vrcp.pop %v2032
    %v2035 = vmul.f32 %v2032, %v2034
    %v2036 = vsub.f32 1.0, %v2035
    %v2037 = vmul.f32 %v2034, %v2036
    %v2038 = vadd.f32 %v2034, %v2037
    %vm2039 = vweird.f32 %v2032
    %vm2040 = vweird.f32 %v2034
    %vm2041 = vmor %vm2039, %vm2040
    %v2042 = vsel %vm2041, %v2034, %v2038
    %v2043 = vand.u32 2147483647, %v2032
    %vm2044 = vcmp.eq.f32.partialorder %v2043, 8.507059e+37
    %v2045 = vand.u32 %v2032, 2147483648
    %v2046 = vor.u32 1.1754944e-38, %v2045
    %v2047 = vsel %vm2044, %v2046, %v2042
    %v2048 = vmul.f32 1.0, %v2047
    %v2049 = vrcp.pop %v2033
    %v2050 = vmul.f32 %v2033, %v2049
    %v2051 = vsub.f32 1.0, %v2050
    %v2052 = vmul.f32 %v2049, %v2051
    %v2053 = vadd.f32 %v2049, %v2052
    %vm2054 = vweird.f32 %v2033
    %vm2055 = vweird.f32 %v2049
    %vm2056 = vmor %vm2054, %vm2055
    %v2057 = vsel %vm2056, %v2049, %v2053
    %v2058 = vand.u32 2147483647, %v2033
    %vm2059 = vcmp.eq.f32.partialorder %v2058, 8.507059e+37
    %v2060 = vand.u32 %v2033, 2147483648
    %v2061 = vor.u32 1.1754944e-38, %v2060
    %v2062 = vsel %vm2059, %v2061, %v2057
    %v2063 = vmul.f32 1.0, %v2062
    %v2064 = vtanh.pop %v2025
    %v2065 = vmul.f32 %v2048, %v1869
    %2067 = vrot.lane.b32.xlu0 %v2064, 64
    %v2068 = vpop.permute.xlu0 %2067
    %v2070 = vmul.f32 %v2048, %v2068
    %2072 = vrot.lane.b32.xlu0 %v2070, 64
    %v2073 = vpop.permute.xlu0 %2072
    %v2075 = vadd.f32 %v2065, %v2073
    %v2076 = vtanh.pop %v2075
    %2078 = vrot.lane.b32.xlu0 %v2076, 64
    %v2079 = vpop.permute.xlu0 %2078
    %v2081 = vmul.f32 %v2063, %v2079
    %v2082 = vld [vmem:[%s6] sm:$0x1]
    %v2084 = vperm.slane %v2082, 0
    %v2086 = vmul.f32 %v1980, %v2084
    %v2087 = vsel %vm422, %v2086, 0.0
    %2088 = vadd.xlane.f32.xlu0 %v2087
    %v2089 = vpop.xlane.xlu0 %2088
    %v2090 = vld [vmem:[%s7] sm:$0x1]
    %v2092 = vperm.slane %v2090, 0
    %v2094 = vmul.f32 %v2081, %v2092
    %v2095 = vsel %vm422, %v2094, 0.0
    %2096 = vadd.xlane.f32.xlu0 %v2095
    %v2097 = vpop.xlane.xlu0 %2096
    %v2098 = vadd.f32 %v2089, %v2097
    %v2099 = vld [vmem:[%s5] sm:$0xff]
    %v2100 = vld [vmem:[#allocation3] sm:$0x1]
    %v2102 = vperm.slane %v2100, 0
    %v2104 = vmul.f32 %v2099, %v2102
    %v2105 = vadd.f32 %v2098, %v2104
    %v2106 = vld [vmem:[#allocation4] sm:$0x1]
    %v2108 = vperm.slane %v2106, 0
    %v2110 = vadd.f32 %v2105, %v2108
    %vm2111 = vcmask 7168
    %2112 = vst.msk [vmem:[%s10] sm:$0xff] %vm2111, %v2110
    // Predicated region
    $region58: #{tpu_custom_call.1} parent=1 // pred_check
      _
    $region59: #{tpu_custom_call.1} parent=1 // pred_check_branch
      %2114 = sbr.rel (0) target = $region61
    $region60: #{tpu_custom_call.1} parent=1 // pred_region
      _
    $region61: #{tpu_custom_call.1} parent=1 // pred_fallthru
      _
    // Predicated region
    $region62: #{tpu_custom_call.1} parent=1 // pred_check
      _
    $region63: #{tpu_custom_call.1} parent=1 // pred_check_branch
      %2116 = sbr.rel (0) target = $region65
    $region64: #{tpu_custom_call.1} parent=1 // pred_region
      _
    $region65: #{tpu_custom_call.1} parent=1 // pred_fallthru
      _
    %2117 = vsyncpa [#allocation6], 1
    %2118 = vsyncpa [#allocation8], 1
    %2119 = vsyncpa [#allocation11], 1

</llo_original>
